<compile_context>
chip_gen: v5e
topology: v5e:2x2
jax: 0.10.0
libtpu: 0.0.40
codegen_flags: <defaults>
</compile_context>

<pallas_src>
import functools

import jax
import jax.numpy as jnp
import numpy as np
from jax.experimental import pallas as pl
from jax.experimental.pallas import tpu as pltpu

VOCAB = 25          # vocab_size
EMBED = 32          # embed_dim
SEQ = 16            # peptide length
BATCH = 2
NUM_CLASSES = 5
EPS = 1e-5          # BatchNorm eps (PyTorch default)


def peptide_kernel(tok_ref, emb_ref,
                   w1_ref, b1_ref, w2_ref, b2_ref, w3_ref, b3_ref,
                   fw1_ref, fb1_ref, fw2_ref, fb2_ref, o_ref, *, seq):
    BL = tok_ref.shape[0]          # block_b * seq rows stacked on sublanes
    BB = BL // seq                 # samples in this grid step
    V = emb_ref.shape[0]           # padded vocab (lane-dense, multiple of 128)

    # ---- embedding: exact row-select via one-hot matmul (f32, exact) ----
    tok = tok_ref[...]                                                   # (BL, 1) int32
    lane = jax.lax.broadcasted_iota(jnp.int32, (BL, V), 1)
    onehot = (lane == tok).astype(jnp.float32)                           # (BL, V)
    h = jnp.dot(onehot, emb_ref[...], preferred_element_type=jnp.float32)  # (BL, E)

    # ---- per-row conv boundary masks (position within each length-seq sample) ----
    row = jax.lax.broadcasted_iota(jnp.int32, (BL, 1), 0)
    if (seq & (seq - 1)) == 0:
        pos = jnp.bitwise_and(row, seq - 1)
    else:
        pos = jax.lax.rem(row, seq)
    first = pos == 0               # l == 0     -> no left neighbour
    last = pos == seq - 1          # l == L-1   -> no right neighbour

    def conv_bn_relu(x, w_ref, b_ref):
        # x: (BL, Cin) f32; w_ref: (3, Cin, Cout) bf16 (BN folded); b_ref: (1, Cout) f32.
        # Shift/mask on the (narrow) inputs, then 3 MXU matmuls with f32 accumulation.
        x_prev = jnp.where(first, 0.0, pltpu.roll(x, shift=1, axis=0))        # x[l-1]
        x_next = jnp.where(last, 0.0, pltpu.roll(x, shift=BL - 1, axis=0))    # x[l+1]
        y = (jnp.dot(x_prev.astype(jnp.bfloat16), w_ref[0], preferred_element_type=jnp.float32)
             + jnp.dot(x.astype(jnp.bfloat16), w_ref[1], preferred_element_type=jnp.float32)
             + jnp.dot(x_next.astype(jnp.bfloat16), w_ref[2], preferred_element_type=jnp.float32)
             + b_ref[...])
        return jnp.maximum(y, 0.0)                                            # (BL, Cout) f32

    h1 = conv_bn_relu(h, w1_ref, b1_ref)      # (BL, 128)
    h2 = conv_bn_relu(h1, w2_ref, b2_ref)     # (BL, 256)
    h3 = conv_bn_relu(h2, w3_ref, b3_ref)     # (BL, 512)

    # AdaptiveMaxPool1d(1): per-sample max over the seq rows of each sample.
    pooled = jnp.max(h3.reshape(BB, seq, h3.shape[-1]), axis=1)               # (BB, 512)

    z = jnp.maximum(
        jnp.dot(pooled.astype(jnp.bfloat16), fw1_ref[...],
                preferred_element_type=jnp.float32) + fb1_ref[...], 0.0)       # (BB, 256)
    # TODO(synk): dropout is identity in eval mode; training-mode RNG mask not implemented.
    out = (jnp.dot(z.astype(jnp.bfloat16), fw2_ref[...],
                   preferred_element_type=jnp.float32) + fb2_ref[...])         # (BB, 128) lane-dense
    o_ref[...] = out.astype(o_ref.dtype)


def forward(tokens, p, block_b=8):
    """tokens: (B, L) int32.  Returns (B, num_classes) f32 logits (eval mode)."""
    B, L = tokens.shape
    block_b = max(1, min(block_b, B))
    B_pad = ((B + block_b - 1) // block_b) * block_b
    if B_pad != B:
        tokens = jnp.pad(tokens, ((0, B_pad - B), (0, 0)))    # padded samples sliced off below
    tok = tokens.reshape(B_pad * L, 1).astype(jnp.int32)

    # Embedding table zero-padded to a lane-dense vocab (multiple of 128), kept f32 (tiny).
    vocab, E = p["embedding"].shape
    vocab_pad = ((vocab + 127) // 128) * 128
    emb = jnp.zeros((vocab_pad, E), jnp.float32).at[:vocab].set(p["embedding"].astype(jnp.float32))

    def fold(wk, bc, gamma, beta, mean, var):
        # Fold eval-mode BatchNorm into the conv weights/bias; store weights bf16.
        scale = gamma / jnp.sqrt(var + EPS)
        w_eff = (wk * scale[None, None, :]).astype(jnp.bfloat16)           # (3, Cin, Cout)
        b_eff = ((bc - mean) * scale + beta).reshape(1, -1).astype(jnp.float32)
        return w_eff, b_eff

    w1, b1 = fold(p["conv1_w"], p["conv1_b"], p["bn1_g"], p["bn1_b"], p["bn1_m"], p["bn1_v"])
    w2, b2 = fold(p["conv2_w"], p["conv2_b"], p["bn2_g"], p["bn2_b"], p["bn2_m"], p["bn2_v"])
    w3, b3 = fold(p["conv3_w"], p["conv3_b"], p["bn3_g"], p["bn3_b"], p["bn3_m"], p["bn3_v"])
    fw1 = p["fc1_w"].astype(jnp.bfloat16)
    fb1 = p["fc1_b"].reshape(1, -1).astype(jnp.float32)

    # Lane-dense padded classifier head.
    nc = p["fc2_w"].shape[-1]
    nc_pad = ((nc + 127) // 128) * 128
    fw2 = jnp.zeros((p["fc2_w"].shape[0], nc_pad), jnp.bfloat16).at[:, :nc].set(
        p["fc2_w"].astype(jnp.bfloat16))
    fb2 = jnp.zeros((1, nc_pad), jnp.float32).at[0, :nc].set(p["fc2_b"].astype(jnp.float32))

    BLt = block_b * L
    grid = (B_pad // block_b,)
    const3 = lambda b: (0, 0, 0)
    const2 = lambda b: (0, 0)

    out = pl.pallas_call(
        functools.partial(peptide_kernel, seq=L),
        out_shape=jax.ShapeDtypeStruct((B_pad, nc_pad), jnp.float32),
        grid_spec=pltpu.PrefetchScalarGridSpec(
            num_scalar_prefetch=0,
            grid=grid,
            in_specs=[
                pl.BlockSpec((BLt, 1), lambda b: (b, 0)),        # tokens (stacked rows)
                pl.BlockSpec(emb.shape, const2),                 # embedding table
                pl.BlockSpec(w1.shape, const3), pl.BlockSpec(b1.shape, const2),
                pl.BlockSpec(w2.shape, const3), pl.BlockSpec(b2.shape, const2),
                pl.BlockSpec(w3.shape, const3), pl.BlockSpec(b3.shape, const2),
                pl.BlockSpec(fw1.shape, const2), pl.BlockSpec(fb1.shape, const2),
                pl.BlockSpec(fw2.shape, const2), pl.BlockSpec(fb2.shape, const2),
            ],
            out_specs=pl.BlockSpec((block_b, nc_pad), lambda b: (b, 0)),
        ),
        compiler_params=pltpu.CompilerParams(
            dimension_semantics=("parallel",)),   # batch steps are independent (v7x 2-TC sharding)
    )(tok, emb, w1, b1, w2, b2, w3, b3, fw1, fb1, fw2, fb2)
    return out[:B, :nc]


def init_params(key):
    ks = iter(jax.random.split(key, 32))
    nrm = lambda k, shape, s=0.1: (s * jax.random.normal(k, shape)).astype(jnp.float32)
    p = {"embedding": nrm(next(ks), (VOCAB, EMBED), 1.0)}
    cin = EMBED
    for i, cout in zip((1, 2, 3), (128, 256, 512)):
        # Conv weights stored directly in kernel layout (3, Cin, Cout)
        # (equivalent to PyTorch (Cout, Cin, 3) transposed).
        p[f"conv{i}_w"] = nrm(next(ks), (3, cin, cout))
        p[f"conv{i}_b"] = nrm(next(ks), (cout,))
        p[f"bn{i}_g"] = 1.0 + nrm(next(ks), (cout,))
        p[f"bn{i}_b"] = nrm(next(ks), (cout,))
        p[f"bn{i}_m"] = nrm(next(ks), (cout,))
        p[f"bn{i}_v"] = 1.0 + jnp.abs(nrm(next(ks), (cout,)))
        cin = cout
    p["fc1_w"] = nrm(next(ks), (512, 256))
    p["fc1_b"] = nrm(next(ks), (256,))
    p["fc2_w"] = nrm(next(ks), (256, NUM_CLASSES))
    p["fc2_b"] = nrm(next(ks), (NUM_CLASSES,))
    return p


def ref_forward(tokens, p):
    """Pure-JAX f32 reference (un-fused BN) for correctness checking."""
    h = jnp.take(p["embedding"], tokens, axis=0).astype(jnp.float32)       # (B, L, E)
    for i in (1, 2, 3):
        w, b = p[f"conv{i}_w"], p[f"conv{i}_b"]
        L = h.shape[1]
        hp = jnp.pad(h, ((0, 0), (1, 1), (0, 0)))
        y = (jnp.einsum("blc,cd->bld", hp[:, 0:L, :], w[0])
             + jnp.einsum("blc,cd->bld", hp[:, 1:L + 1, :], w[1])
             + jnp.einsum("blc,cd->bld", hp[:, 2:L + 2, :], w[2])) + b
        y = (y - p[f"bn{i}_m"]) / jnp.sqrt(p[f"bn{i}_v"] + EPS) * p[f"bn{i}_g"] + p[f"bn{i}_b"]
        h = jnp.maximum(y, 0.0)
    pooled = jnp.max(h, axis=1)                                            # (B, 512)
    z = jnp.maximum(pooled @ p["fc1_w"] + p["fc1_b"], 0.0)
    return z @ p["fc2_w"] + p["fc2_b"]


if __name__ == "__main__":
    key = jax.random.PRNGKey(0)
    kp, kt = jax.random.split(key)
    params = init_params(kp)
    tokens = jax.random.randint(kt, (BATCH, SEQ), 0, VOCAB, dtype=jnp.int32)

    logits = jax.block_until_ready(jax.jit(forward)(tokens, params))
    ref = jax.block_until_ready(ref_forward(tokens, params))

    assert logits.shape == (BATCH, NUM_CLASSES), logits.shape
    # Kernel uses bf16 weights/matmul inputs (f32 accumulation) vs the f32
    # reference, so check the error relative to the overall logit scale.
    l, r = np.asarray(logits), np.asarray(ref)
    rel_err = np.max(np.abs(l - r)) / (np.max(np.abs(r)) + 1e-6)
    assert rel_err < 5e-2, f"relative error too large: {rel_err}"
    print("KERNEL_OK")
</pallas_src>

<mosaic_0001>
module attributes {stable_mosaic.version = 11 : i64} {
  func.func @peptide_kernel(%arg0: i32, %arg1: memref<32x1xi32, #tpu.memory_space<vmem>>, %arg2: memref<128x32xf32, #tpu.memory_space<vmem>>, %arg3: memref<3x32x128xbf16, #tpu.memory_space<vmem>>, %arg4: memref<1x128xf32, #tpu.memory_space<vmem>>, %arg5: memref<3x128x256xbf16, #tpu.memory_space<vmem>>, %arg6: memref<1x256xf32, #tpu.memory_space<vmem>>, %arg7: memref<3x256x512xbf16, #tpu.memory_space<vmem>>, %arg8: memref<1x512xf32, #tpu.memory_space<vmem>>, %arg9: memref<512x256xbf16, #tpu.memory_space<vmem>>, %arg10: memref<1x256xf32, #tpu.memory_space<vmem>>, %arg11: memref<256x128xbf16, #tpu.memory_space<vmem>>, %arg12: memref<1x128xf32, #tpu.memory_space<vmem>>, %arg13: memref<2x128xf32, #tpu.memory_space<vmem>>) attributes {dimension_semantics = [#tpu.dimension_semantics<parallel>], iteration_bounds = array<i64: 1>, scalar_prefetch = 0 : i64, scratch_operands = 0 : i64, tpu.core_type = #tpu.core_type<tc>, window_params = [{transform_indices = @transform_0, window_bounds = array<i64: 32, 1>}, {pipeline_mode = #tpu.pipeline_mode<synchronous>, transform_indices = @transform_1, window_bounds = array<i64: 128, 32>}, {pipeline_mode = #tpu.pipeline_mode<synchronous>, transform_indices = @transform_2, window_bounds = array<i64: 3, 32, 128>}, {pipeline_mode = #tpu.pipeline_mode<synchronous>, transform_indices = @transform_3, window_bounds = array<i64: 1, 128>}, {pipeline_mode = #tpu.pipeline_mode<synchronous>, transform_indices = @transform_4, window_bounds = array<i64: 3, 128, 256>}, {pipeline_mode = #tpu.pipeline_mode<synchronous>, transform_indices = @transform_5, window_bounds = array<i64: 1, 256>}, {pipeline_mode = #tpu.pipeline_mode<synchronous>, transform_indices = @transform_6, window_bounds = array<i64: 3, 256, 512>}, {pipeline_mode = #tpu.pipeline_mode<synchronous>, transform_indices = @transform_7, window_bounds = array<i64: 1, 512>}, {pipeline_mode = #tpu.pipeline_mode<synchronous>, transform_indices = @transform_8, window_bounds = array<i64: 512, 256>}, {pipeline_mode = #tpu.pipeline_mode<synchronous>, transform_indices = @transform_9, window_bounds = array<i64: 1, 256>}, {pipeline_mode = #tpu.pipeline_mode<synchronous>, transform_indices = @transform_10, window_bounds = array<i64: 256, 128>}, {pipeline_mode = #tpu.pipeline_mode<synchronous>, transform_indices = @transform_11, window_bounds = array<i64: 1, 128>}, {transform_indices = @transform_12, window_bounds = array<i64: 2, 128>}]} {
    %c0 = arith.constant 0 : index
    %c0_0 = arith.constant 0 : index
    %0 = vector.load %arg1[%c0, %c0_0] : memref<32x1xi32, #tpu.memory_space<vmem>>, vector<32x1xi32>
    %1 = tpu.iota {dimensions = array<i32: 1>} : vector<32x128xi32>
    %2 = vector.broadcast %0 : vector<32x1xi32> to vector<32x128xi32>
    %3 = arith.cmpi eq, %1, %2 : vector<32x128xi32>
    %4 = arith.extui %3 : vector<32x128xi1> to vector<32x128xi32>
    %5 = arith.sitofp %4 : vector<32x128xi32> to vector<32x128xf32>
    %c0_1 = arith.constant 0 : index
    %c0_2 = arith.constant 0 : index
    %6 = vector.load %arg2[%c0_1, %c0_2] : memref<128x32xf32, #tpu.memory_space<vmem>>, vector<128x32xf32>
    %cst = arith.constant dense<0.000000e+00> : vector<32x32xf32>
    %7 = tpu.matmul %5, %6, %cst {dimension_numbers = #tpu.dot_dimension_numbers<[1], [0], [0], [1], [0, 0, 1, 1], [], []>} : vector<32x128xf32>, vector<128x32xf32>, vector<32x32xf32> -> vector<32x32xf32>
    %8 = tpu.iota {dimensions = array<i32: 0>} : vector<32x1xi32>
    %c15_i32 = arith.constant 15 : i32
    %9 = vector.broadcast %c15_i32 : i32 to vector<32x1xi32>
    %10 = arith.andi %8, %9 : vector<32x1xi32>
    %c0_i32 = arith.constant 0 : i32
    %11 = vector.broadcast %c0_i32 : i32 to vector<32x1xi32>
    %12 = arith.cmpi eq, %10, %11 : vector<32x1xi32>
    %c15_i32_3 = arith.constant 15 : i32
    %13 = vector.broadcast %c15_i32_3 : i32 to vector<32x1xi32>
    %14 = arith.cmpi eq, %10, %13 : vector<32x1xi32>
    %c1_i32 = arith.constant 1 : i32
    %15 = tpu.dynamic_rotate %7 by %c1_i32 dim 0 : vector<32x32xf32>, i32 -> vector<32x32xf32>
    %cst_4 = arith.constant 0.000000e+00 : f32
    %16 = vector.shape_cast %12 : vector<32x1xi1> to vector<32x1xi1>
    %17 = vector.broadcast %16 : vector<32x1xi1> to vector<32x32xi1>
    %18 = vector.broadcast %cst_4 : f32 to vector<32x32xf32>
    %19 = arith.select %17, %18, %15 : vector<32x32xi1>, vector<32x32xf32>
    %c31_i32 = arith.constant 31 : i32
    %20 = tpu.dynamic_rotate %7 by %c31_i32 dim 0 : vector<32x32xf32>, i32 -> vector<32x32xf32>
    %cst_5 = arith.constant 0.000000e+00 : f32
    %21 = vector.shape_cast %14 : vector<32x1xi1> to vector<32x1xi1>
    %22 = vector.broadcast %21 : vector<32x1xi1> to vector<32x32xi1>
    %23 = vector.broadcast %cst_5 : f32 to vector<32x32xf32>
    %24 = arith.select %22, %23, %20 : vector<32x32xi1>, vector<32x32xf32>
    %25 = arith.truncf %19 : vector<32x32xf32> to vector<32x32xbf16>
    %c0_6 = arith.constant 0 : index
    %c0_7 = arith.constant 0 : index
    %c0_8 = arith.constant 0 : index
    %26 = vector.load %arg3[%c0_6, %c0_7, %c0_8] : memref<3x32x128xbf16, #tpu.memory_space<vmem>>, vector<1x32x128xbf16>
    %27 = vector.shape_cast %26 : vector<1x32x128xbf16> to vector<32x128xbf16>
    %cst_9 = arith.constant dense<0.000000e+00> : vector<32x128xf32>
    %28 = tpu.matmul %25, %27, %cst_9 {dimension_numbers = #tpu.dot_dimension_numbers<[1], [0], [0], [1], [0, 0, 1, 1], [], []>} : vector<32x32xbf16>, vector<32x128xbf16>, vector<32x128xf32> -> vector<32x128xf32>
    %29 = arith.truncf %7 : vector<32x32xf32> to vector<32x32xbf16>
    %c1 = arith.constant 1 : index
    %c0_10 = arith.constant 0 : index
    %c0_11 = arith.constant 0 : index
    %30 = vector.load %arg3[%c1, %c0_10, %c0_11] : memref<3x32x128xbf16, #tpu.memory_space<vmem>>, vector<1x32x128xbf16>
    %31 = vector.shape_cast %30 : vector<1x32x128xbf16> to vector<32x128xbf16>
    %cst_12 = arith.constant dense<0.000000e+00> : vector<32x128xf32>
    %32 = tpu.matmul %29, %31, %cst_12 {dimension_numbers = #tpu.dot_dimension_numbers<[1], [0], [0], [1], [0, 0, 1, 1], [], []>} : vector<32x32xbf16>, vector<32x128xbf16>, vector<32x128xf32> -> vector<32x128xf32>
    %33 = arith.addf %28, %32 : vector<32x128xf32>
    %34 = arith.truncf %24 : vector<32x32xf32> to vector<32x32xbf16>
    %c2 = arith.constant 2 : index
    %c0_13 = arith.constant 0 : index
    %c0_14 = arith.constant 0 : index
    %35 = vector.load %arg3[%c2, %c0_13, %c0_14] : memref<3x32x128xbf16, #tpu.memory_space<vmem>>, vector<1x32x128xbf16>
    %36 = vector.shape_cast %35 : vector<1x32x128xbf16> to vector<32x128xbf16>
    %cst_15 = arith.constant dense<0.000000e+00> : vector<32x128xf32>
    %37 = tpu.matmul %34, %36, %cst_15 {dimension_numbers = #tpu.dot_dimension_numbers<[1], [0], [0], [1], [0, 0, 1, 1], [], []>} : vector<32x32xbf16>, vector<32x128xbf16>, vector<32x128xf32> -> vector<32x128xf32>
    %38 = arith.addf %33, %37 : vector<32x128xf32>
    %c0_16 = arith.constant 0 : index
    %c0_17 = arith.constant 0 : index
    %39 = vector.load %arg4[%c0_16, %c0_17] : memref<1x128xf32, #tpu.memory_space<vmem>>, vector<1x128xf32>
    %40 = vector.broadcast %39 : vector<1x128xf32> to vector<32x128xf32>
    %41 = arith.addf %38, %40 : vector<32x128xf32>
    %cst_18 = arith.constant 0.000000e+00 : f32
    %42 = vector.broadcast %cst_18 : f32 to vector<32x128xf32>
    %43 = arith.maximumf %41, %42 : vector<32x128xf32>
    %c1_i32_19 = arith.constant 1 : i32
    %44 = tpu.dynamic_rotate %43 by %c1_i32_19 dim 0 : vector<32x128xf32>, i32 -> vector<32x128xf32>
    %cst_20 = arith.constant 0.000000e+00 : f32
    %45 = vector.shape_cast %12 : vector<32x1xi1> to vector<32x1xi1>
    %46 = vector.broadcast %45 : vector<32x1xi1> to vector<32x128xi1>
    %47 = vector.broadcast %cst_20 : f32 to vector<32x128xf32>
    %48 = arith.select %46, %47, %44 : vector<32x128xi1>, vector<32x128xf32>
    %c31_i32_21 = arith.constant 31 : i32
    %49 = tpu.dynamic_rotate %43 by %c31_i32_21 dim 0 : vector<32x128xf32>, i32 -> vector<32x128xf32>
    %cst_22 = arith.constant 0.000000e+00 : f32
    %50 = vector.shape_cast %14 : vector<32x1xi1> to vector<32x1xi1>
    %51 = vector.broadcast %50 : vector<32x1xi1> to vector<32x128xi1>
    %52 = vector.broadcast %cst_22 : f32 to vector<32x128xf32>
    %53 = arith.select %51, %52, %49 : vector<32x128xi1>, vector<32x128xf32>
    %54 = arith.truncf %48 : vector<32x128xf32> to vector<32x128xbf16>
    %c0_23 = arith.constant 0 : index
    %c0_24 = arith.constant 0 : index
    %c0_25 = arith.constant 0 : index
    %55 = vector.load %arg5[%c0_23, %c0_24, %c0_25] : memref<3x128x256xbf16, #tpu.memory_space<vmem>>, vector<1x128x256xbf16>
    %56 = vector.shape_cast %55 : vector<1x128x256xbf16> to vector<128x256xbf16>
    %cst_26 = arith.constant dense<0.000000e+00> : vector<32x256xf32>
    %57 = tpu.matmul %54, %56, %cst_26 {dimension_numbers = #tpu.dot_dimension_numbers<[1], [0], [0], [1], [0, 0, 1, 1], [], []>} : vector<32x128xbf16>, vector<128x256xbf16>, vector<32x256xf32> -> vector<32x256xf32>
    %58 = arith.truncf %43 : vector<32x128xf32> to vector<32x128xbf16>
    %c1_27 = arith.constant 1 : index
    %c0_28 = arith.constant 0 : index
    %c0_29 = arith.constant 0 : index
    %59 = vector.load %arg5[%c1_27, %c0_28, %c0_29] : memref<3x128x256xbf16, #tpu.memory_space<vmem>>, vector<1x128x256xbf16>
    %60 = vector.shape_cast %59 : vector<1x128x256xbf16> to vector<128x256xbf16>
    %cst_30 = arith.constant dense<0.000000e+00> : vector<32x256xf32>
    %61 = tpu.matmul %58, %60, %cst_30 {dimension_numbers = #tpu.dot_dimension_numbers<[1], [0], [0], [1], [0, 0, 1, 1], [], []>} : vector<32x128xbf16>, vector<128x256xbf16>, vector<32x256xf32> -> vector<32x256xf32>
    %62 = arith.addf %57, %61 : vector<32x256xf32>
    %63 = arith.truncf %53 : vector<32x128xf32> to vector<32x128xbf16>
    %c2_31 = arith.constant 2 : index
    %c0_32 = arith.constant 0 : index
    %c0_33 = arith.constant 0 : index
    %64 = vector.load %arg5[%c2_31, %c0_32, %c0_33] : memref<3x128x256xbf16, #tpu.memory_space<vmem>>, vector<1x128x256xbf16>
    %65 = vector.shape_cast %64 : vector<1x128x256xbf16> to vector<128x256xbf16>
    %cst_34 = arith.constant dense<0.000000e+00> : vector<32x256xf32>
    %66 = tpu.matmul %63, %65, %cst_34 {dimension_numbers = #tpu.dot_dimension_numbers<[1], [0], [0], [1], [0, 0, 1, 1], [], []>} : vector<32x128xbf16>, vector<128x256xbf16>, vector<32x256xf32> -> vector<32x256xf32>
    %67 = arith.addf %62, %66 : vector<32x256xf32>
    %c0_35 = arith.constant 0 : index
    %c0_36 = arith.constant 0 : index
    %68 = vector.load %arg6[%c0_35, %c0_36] : memref<1x256xf32, #tpu.memory_space<vmem>>, vector<1x256xf32>
    %69 = vector.broadcast %68 : vector<1x256xf32> to vector<32x256xf32>
    %70 = arith.addf %67, %69 : vector<32x256xf32>
    %cst_37 = arith.constant 0.000000e+00 : f32
    %71 = vector.broadcast %cst_37 : f32 to vector<32x256xf32>
    %72 = arith.maximumf %70, %71 : vector<32x256xf32>
    %c1_i32_38 = arith.constant 1 : i32
    %73 = tpu.dynamic_rotate %72 by %c1_i32_38 dim 0 : vector<32x256xf32>, i32 -> vector<32x256xf32>
    %cst_39 = arith.constant 0.000000e+00 : f32
    %74 = vector.shape_cast %12 : vector<32x1xi1> to vector<32x1xi1>
    %75 = vector.broadcast %74 : vector<32x1xi1> to vector<32x256xi1>
    %76 = vector.broadcast %cst_39 : f32 to vector<32x256xf32>
    %77 = arith.select %75, %76, %73 : vector<32x256xi1>, vector<32x256xf32>
    %c31_i32_40 = arith.constant 31 : i32
    %78 = tpu.dynamic_rotate %72 by %c31_i32_40 dim 0 : vector<32x256xf32>, i32 -> vector<32x256xf32>
    %cst_41 = arith.constant 0.000000e+00 : f32
    %79 = vector.shape_cast %14 : vector<32x1xi1> to vector<32x1xi1>
    %80 = vector.broadcast %79 : vector<32x1xi1> to vector<32x256xi1>
    %81 = vector.broadcast %cst_41 : f32 to vector<32x256xf32>
    %82 = arith.select %80, %81, %78 : vector<32x256xi1>, vector<32x256xf32>
    %83 = arith.truncf %77 : vector<32x256xf32> to vector<32x256xbf16>
    %c0_42 = arith.constant 0 : index
    %c0_43 = arith.constant 0 : index
    %c0_44 = arith.constant 0 : index
    %84 = vector.load %arg7[%c0_42, %c0_43, %c0_44] : memref<3x256x512xbf16, #tpu.memory_space<vmem>>, vector<1x256x512xbf16>
    %85 = vector.shape_cast %84 : vector<1x256x512xbf16> to vector<256x512xbf16>
    %cst_45 = arith.constant dense<0.000000e+00> : vector<32x512xf32>
    %86 = tpu.matmul %83, %85, %cst_45 {dimension_numbers = #tpu.dot_dimension_numbers<[1], [0], [0], [1], [0, 0, 1, 1], [], []>} : vector<32x256xbf16>, vector<256x512xbf16>, vector<32x512xf32> -> vector<32x512xf32>
    %87 = arith.truncf %72 : vector<32x256xf32> to vector<32x256xbf16>
    %c1_46 = arith.constant 1 : index
    %c0_47 = arith.constant 0 : index
    %c0_48 = arith.constant 0 : index
    %88 = vector.load %arg7[%c1_46, %c0_47, %c0_48] : memref<3x256x512xbf16, #tpu.memory_space<vmem>>, vector<1x256x512xbf16>
    %89 = vector.shape_cast %88 : vector<1x256x512xbf16> to vector<256x512xbf16>
    %cst_49 = arith.constant dense<0.000000e+00> : vector<32x512xf32>
    %90 = tpu.matmul %87, %89, %cst_49 {dimension_numbers = #tpu.dot_dimension_numbers<[1], [0], [0], [1], [0, 0, 1, 1], [], []>} : vector<32x256xbf16>, vector<256x512xbf16>, vector<32x512xf32> -> vector<32x512xf32>
    %91 = arith.addf %86, %90 : vector<32x512xf32>
    %92 = arith.truncf %82 : vector<32x256xf32> to vector<32x256xbf16>
    %c2_50 = arith.constant 2 : index
    %c0_51 = arith.constant 0 : index
    %c0_52 = arith.constant 0 : index
    %93 = vector.load %arg7[%c2_50, %c0_51, %c0_52] : memref<3x256x512xbf16, #tpu.memory_space<vmem>>, vector<1x256x512xbf16>
    %94 = vector.shape_cast %93 : vector<1x256x512xbf16> to vector<256x512xbf16>
    %cst_53 = arith.constant dense<0.000000e+00> : vector<32x512xf32>
    %95 = tpu.matmul %92, %94, %cst_53 {dimension_numbers = #tpu.dot_dimension_numbers<[1], [0], [0], [1], [0, 0, 1, 1], [], []>} : vector<32x256xbf16>, vector<256x512xbf16>, vector<32x512xf32> -> vector<32x512xf32>
    %96 = arith.addf %91, %95 : vector<32x512xf32>
    %c0_54 = arith.constant 0 : index
    %c0_55 = arith.constant 0 : index
    %97 = vector.load %arg8[%c0_54, %c0_55] : memref<1x512xf32, #tpu.memory_space<vmem>>, vector<1x512xf32>
    %98 = vector.broadcast %97 : vector<1x512xf32> to vector<32x512xf32>
    %99 = arith.addf %96, %98 : vector<32x512xf32>
    %cst_56 = arith.constant 0.000000e+00 : f32
    %100 = vector.broadcast %cst_56 : f32 to vector<32x512xf32>
    %101 = arith.maximumf %99, %100 : vector<32x512xf32>
    %102 = vector.shape_cast %101 : vector<32x512xf32> to vector<2x16x512xf32>
    %cst_57 = arith.constant dense<0xFF800000> : vector<2x512xf32>
    %103 = vector.multi_reduction <maximumf>, %102, %cst_57 [1] : vector<2x16x512xf32> to vector<2x512xf32>
    %104 = arith.truncf %103 : vector<2x512xf32> to vector<2x512xbf16>
    %c0_58 = arith.constant 0 : index
    %c0_59 = arith.constant 0 : index
    %105 = vector.load %arg9[%c0_58, %c0_59] : memref<512x256xbf16, #tpu.memory_space<vmem>>, vector<512x256xbf16>
    %cst_60 = arith.constant dense<0.000000e+00> : vector<2x256xf32>
    %106 = tpu.matmul %104, %105, %cst_60 {dimension_numbers = #tpu.dot_dimension_numbers<[1], [0], [0], [1], [0, 0, 1, 1], [], []>} : vector<2x512xbf16>, vector<512x256xbf16>, vector<2x256xf32> -> vector<2x256xf32>
    %c0_61 = arith.constant 0 : index
    %c0_62 = arith.constant 0 : index
    %107 = vector.load %arg10[%c0_61, %c0_62] : memref<1x256xf32, #tpu.memory_space<vmem>>, vector<1x256xf32>
    %108 = vector.broadcast %107 : vector<1x256xf32> to vector<2x256xf32>
    %109 = arith.addf %106, %108 : vector<2x256xf32>
    %cst_63 = arith.constant 0.000000e+00 : f32
    %110 = vector.broadcast %cst_63 : f32 to vector<2x256xf32>
    %111 = arith.maximumf %109, %110 : vector<2x256xf32>
    %112 = arith.truncf %111 : vector<2x256xf32> to vector<2x256xbf16>
    %c0_64 = arith.constant 0 : index
    %c0_65 = arith.constant 0 : index
    %113 = vector.load %arg11[%c0_64, %c0_65] : memref<256x128xbf16, #tpu.memory_space<vmem>>, vector<256x128xbf16>
    %cst_66 = arith.constant dense<0.000000e+00> : vector<2x128xf32>
    %114 = tpu.matmul %112, %113, %cst_66 {dimension_numbers = #tpu.dot_dimension_numbers<[1], [0], [0], [1], [0, 0, 1, 1], [], []>} : vector<2x256xbf16>, vector<256x128xbf16>, vector<2x128xf32> -> vector<2x128xf32>
    %c0_67 = arith.constant 0 : index
    %c0_68 = arith.constant 0 : index
    %115 = vector.load %arg12[%c0_67, %c0_68] : memref<1x128xf32, #tpu.memory_space<vmem>>, vector<1x128xf32>
    %116 = vector.broadcast %115 : vector<1x128xf32> to vector<2x128xf32>
    %117 = arith.addf %114, %116 : vector<2x128xf32>
    %c0_69 = arith.constant 0 : index
    %c0_70 = arith.constant 0 : index
    %118 = vector.load %arg13[%c0_69, %c0_70] : memref<2x128xf32, #tpu.memory_space<vmem>>, vector<2x128xf32>
    tpu.vector_store %arg13[%c0_69, %c0_70], %117 {strides = array<i32>} : memref<2x128xf32, #tpu.memory_space<vmem>>, vector<2x128xf32>,
    return
  }
  func.func @transform_0(%arg0: i32) -> (i32, i32) {
    %c0_i32 = arith.constant 0 : i32
    %c0_i32_0 = arith.constant 0 : i32
    return %arg0, %c0_i32 : i32, i32
  }
  func.func @transform_1(%arg0: i32) -> (i32, i32) {
    %c0_i32 = arith.constant 0 : i32
    %c0_i32_0 = arith.constant 0 : i32
    %c0_i32_1 = arith.constant 0 : i32
    return %c0_i32, %c0_i32_0 : i32, i32
  }
  func.func @transform_2(%arg0: i32) -> (i32, i32, i32) {
    %c0_i32 = arith.constant 0 : i32
    %c0_i32_0 = arith.constant 0 : i32
    %c0_i32_1 = arith.constant 0 : i32
    %c0_i32_2 = arith.constant 0 : i32
    return %c0_i32, %c0_i32_0, %c0_i32_1 : i32, i32, i32
  }
  func.func @transform_3(%arg0: i32) -> (i32, i32) {
    %c0_i32 = arith.constant 0 : i32
    %c0_i32_0 = arith.constant 0 : i32
    %c0_i32_1 = arith.constant 0 : i32
    return %c0_i32, %c0_i32_0 : i32, i32
  }
  func.func @transform_4(%arg0: i32) -> (i32, i32, i32) {
    %c0_i32 = arith.constant 0 : i32
    %c0_i32_0 = arith.constant 0 : i32
    %c0_i32_1 = arith.constant 0 : i32
    %c0_i32_2 = arith.constant 0 : i32
    return %c0_i32, %c0_i32_0, %c0_i32_1 : i32, i32, i32
  }
  func.func @transform_5(%arg0: i32) -> (i32, i32) {
    %c0_i32 = arith.constant 0 : i32
    %c0_i32_0 = arith.constant 0 : i32
    %c0_i32_1 = arith.constant 0 : i32
    return %c0_i32, %c0_i32_0 : i32, i32
  }
  func.func @transform_6(%arg0: i32) -> (i32, i32, i32) {
    %c0_i32 = arith.constant 0 : i32
    %c0_i32_0 = arith.constant 0 : i32
    %c0_i32_1 = arith.constant 0 : i32
    %c0_i32_2 = arith.constant 0 : i32
    return %c0_i32, %c0_i32_0, %c0_i32_1 : i32, i32, i32
  }
  func.func @transform_7(%arg0: i32) -> (i32, i32) {
    %c0_i32 = arith.constant 0 : i32
    %c0_i32_0 = arith.constant 0 : i32
    %c0_i32_1 = arith.constant 0 : i32
    return %c0_i32, %c0_i32_0 : i32, i32
  }
  func.func @transform_8(%arg0: i32) -> (i32, i32) {
    %c0_i32 = arith.constant 0 : i32
    %c0_i32_0 = arith.constant 0 : i32
    %c0_i32_1 = arith.constant 0 : i32
    return %c0_i32, %c0_i32_0 : i32, i32
  }
  func.func @transform_9(%arg0: i32) -> (i32, i32) {
    %c0_i32 = arith.constant 0 : i32
    %c0_i32_0 = arith.constant 0 : i32
    %c0_i32_1 = arith.constant 0 : i32
    return %c0_i32, %c0_i32_0 : i32, i32
  }
  func.func @transform_10(%arg0: i32) -> (i32, i32) {
    %c0_i32 = arith.constant 0 : i32
    %c0_i32_0 = arith.constant 0 : i32
    %c0_i32_1 = arith.constant 0 : i32
    return %c0_i32, %c0_i32_0 : i32, i32
  }
  func.func @transform_11(%arg0: i32) -> (i32, i32) {
    %c0_i32 = arith.constant 0 : i32
    %c0_i32_0 = arith.constant 0 : i32
    %c0_i32_1 = arith.constant 0 : i32
    return %c0_i32, %c0_i32_0 : i32, i32
  }
  func.func @transform_12(%arg0: i32) -> (i32, i32) {
    %c0_i32 = arith.constant 0 : i32
    %c0_i32_0 = arith.constant 0 : i32
    return %arg0, %c0_i32 : i32, i32
  }
}

</mosaic_0001>

<llo_original>
// kernel: forward.1
$region0: #{forward.1}
  #allocation0 [shape = 'u32[]', space=smem, size = 0x4, offset = 0x4, fixed_abs, tag = 'smem constant byte address 0x4 - core index']
  #allocation1 [shape = 'u32[72,128]{1,0:T(1,128)}', space=vmem, size = 0x9000, scoped, tag = 'internal scratch']
  %s0 = inlined_call_operand.vmem [shape: s32[32,1], index: 0, kind: input, shape index: {}]
  %s1 = inlined_call_operand.vmem [shape: f32[128,32], index: 1, kind: input, shape index: {}]
  %s2 = inlined_call_operand.vmem [shape: bf16[3,32,128], index: 2, kind: input, shape index: {}]
  %s3 = inlined_call_operand.vmem [shape: f32[1,128], index: 3, kind: input, shape index: {}]
  %s4 = inlined_call_operand.vmem [shape: bf16[3,128,256], index: 4, kind: input, shape index: {}]
  %s5 = inlined_call_operand.vmem [shape: f32[1,256], index: 5, kind: input, shape index: {}]
  %s6 = inlined_call_operand.vmem [shape: bf16[3,256,512], index: 6, kind: input, shape index: {}]
  %s7 = inlined_call_operand.vmem [shape: f32[1,512], index: 7, kind: input, shape index: {}]
  %s8 = inlined_call_operand.vmem [shape: bf16[512,256], index: 8, kind: input, shape index: {}]
  %s9 = inlined_call_operand.vmem [shape: f32[1,256], index: 9, kind: input, shape index: {}]
  %s10 = inlined_call_operand.vmem [shape: bf16[256,128], index: 10, kind: input, shape index: {}]
  %s11 = inlined_call_operand.vmem [shape: f32[1,128], index: 11, kind: input, shape index: {}]
  %s12 = inlined_call_operand.hbm [shape: f32[2,128], index: 12, kind: output, shape index: {}]
  %s13 = sld [smem:[#allocation0]]
  $region58: #{forward.1} parent=0
    _
  %s15 = ssub.s32 1, %s13
  %s16 = scalar_select 0, %s15, %s13
  $region1: #{forward.1} parent=0
    #allocation2 [shape = 'u8[1024]{0}', space=vmem, size = 0x400, scoped, tag = 'output window, operand 0, single buffered']
    #allocation3 [shape = 's32[1]{0}', space=sflag, size = 0x4, scoped, tag = 'scoped memory for forward.1']
    %17 = vsyncpa [#allocation3], 0
    // Predicated region
    $region2: #{forward.1} parent=1 // pred_check
      _
    $region3: #{forward.1} parent=1 // pred_check_branch
      %19 = sbr.rel (0) target = $region5
    $region4: #{forward.1} parent=1 // pred_region
      _
    $region5: #{forward.1} parent=1 // pred_fallthru
      _
    // Predicated region
    $region6: #{forward.1} parent=1 // pred_check
      _
    $region7: #{forward.1} parent=1 // pred_check_branch
      %21 = sbr.rel (0) target = $region9
    $region8: #{forward.1} parent=1 // pred_region
      _
    $region9: #{forward.1} parent=1 // pred_fallthru
      _
    // Predicated region
    $region10: #{forward.1} parent=1 // pred_check
      _
    $region11: #{forward.1} parent=1 // pred_check_branch
      %23 = sbr.rel (0) target = $region13
    $region12: #{forward.1} parent=1 // pred_region
      _
    $region13: #{forward.1} parent=1 // pred_fallthru
      _
    // Predicated region
    $region14: #{forward.1} parent=1 // pred_check
      _
    $region15: #{forward.1} parent=1 // pred_check_branch
      %25 = sbr.rel (0) target = $region17
    $region16: #{forward.1} parent=1 // pred_region
      _
    $region17: #{forward.1} parent=1 // pred_fallthru
      _
    // Predicated region
    $region18: #{forward.1} parent=1 // pred_check
      _
    $region19: #{forward.1} parent=1 // pred_check_branch
      %27 = sbr.rel (0) target = $region21
    $region20: #{forward.1} parent=1 // pred_region
      _
    $region21: #{forward.1} parent=1 // pred_fallthru
      _
    // Predicated region
    $region22: #{forward.1} parent=1 // pred_check
      _
    $region23: #{forward.1} parent=1 // pred_check_branch
      %29 = sbr.rel (0) target = $region25
    $region24: #{forward.1} parent=1 // pred_region
      _
    $region25: #{forward.1} parent=1 // pred_fallthru
      _
    // Predicated region
    $region26: #{forward.1} parent=1 // pred_check
      _
    $region27: #{forward.1} parent=1 // pred_check_branch
      %31 = sbr.rel (0) target = $region29
    $region28: #{forward.1} parent=1 // pred_region
      _
    $region29: #{forward.1} parent=1 // pred_fallthru
      _
    // Predicated region
    $region30: #{forward.1} parent=1 // pred_check
      _
    $region31: #{forward.1} parent=1 // pred_check_branch
      %33 = sbr.rel (0) target = $region33
    $region32: #{forward.1} parent=1 // pred_region
      _
    $region33: #{forward.1} parent=1 // pred_fallthru
      _
    // Predicated region
    $region34: #{forward.1} parent=1 // pred_check
      _
    $region35: #{forward.1} parent=1 // pred_check_branch
      %35 = sbr.rel (0) target = $region37
    $region36: #{forward.1} parent=1 // pred_region
      _
    $region37: #{forward.1} parent=1 // pred_fallthru
      _
    // Predicated region
    $region38: #{forward.1} parent=1 // pred_check
      _
    $region39: #{forward.1} parent=1 // pred_check_branch
      %37 = sbr.rel (0) target = $region41
    $region40: #{forward.1} parent=1 // pred_region
      _
    $region41: #{forward.1} parent=1 // pred_fallthru
      _
    // Predicated region
    $region42: #{forward.1} parent=1 // pred_check
      _
    $region43: #{forward.1} parent=1 // pred_check_branch
      %39 = sbr.rel (0) target = $region45
    $region44: #{forward.1} parent=1 // pred_region
      _
    $region45: #{forward.1} parent=1 // pred_fallthru
      _
    // Predicated region
    $region46: #{forward.1} parent=1 // pred_check
      _
    $region47: #{forward.1} parent=1 // pred_check_branch
      %41 = sbr.rel (0) target = $region49
    $region48: #{forward.1} parent=1 // pred_region
      _
    $region49: #{forward.1} parent=1 // pred_fallthru
      _
    %v43 = vld [vmem:[%s0] sm:$0xff]
    %v44 = vld [vmem:[%s0 + $0x8] sm:$0xff]
    %v45 = vld [vmem:[%s0 + $0x10] sm:$0xff]
    %v46 = vld [vmem:[%s0 + $0x18] sm:$0xff]
    %v47 = vlaneseq
    %v48 = vand.u32 %v47, 127
    %49 = vset.pattern.permute.xlu0 0
    %50 = vperm.xlu0 %49, %v43
    %v51 = vpop.permute.xlu0 %50
    %52 = vset.pattern.permute.xlu0 0
    %53 = vperm.xlu0 %52, %v44
    %v54 = vpop.permute.xlu0 %53
    %55 = vset.pattern.permute.xlu0 0
    %56 = vperm.xlu0 %55, %v45
    %v57 = vpop.permute.xlu0 %56
    %58 = vset.pattern.permute.xlu0 0
    %59 = vperm.xlu0 %58, %v46
    %v60 = vpop.permute.xlu0 %59
    %vm61 = vcmp.eq.s32.totalorder %v48, %v51
    %vm62 = vcmp.eq.s32.totalorder %v48, %v54
    %vm63 = vcmp.eq.s32.totalorder %v48, %v57
    %vm64 = vcmp.eq.s32.totalorder %v48, %v60
    %v65 = vsel %vm61, 1, 0
    %v66 = vsel %vm62, 1, 0
    %v67 = vsel %vm63, 1, 0
    %v68 = vsel %vm64, 1, 0
    %v69 = vcvt.s32.f32 %v65
    %v70 = vcvt.s32.f32 %v66
    %v71 = vcvt.s32.f32 %v67
    %v72 = vcvt.s32.f32 %v68
    %v73 = vld [vmem:[%s1] sm:$0xff]
    %v74 = vld [vmem:[%s1 + $0x8] sm:$0xff]
    %v75 = vld [vmem:[%s1 + $0x10] sm:$0xff]
    %v76 = vld [vmem:[%s1 + $0x18] sm:$0xff]
    %v77 = vld [vmem:[%s1 + $0x20] sm:$0xff]
    %v78 = vld [vmem:[%s1 + $0x28] sm:$0xff]
    %v79 = vld [vmem:[%s1 + $0x30] sm:$0xff]
    %v80 = vld [vmem:[%s1 + $0x38] sm:$0xff]
    %v81 = vld [vmem:[%s1 + $0x40] sm:$0xff]
    %v82 = vld [vmem:[%s1 + $0x48] sm:$0xff]
    %v83 = vld [vmem:[%s1 + $0x50] sm:$0xff]
    %v84 = vld [vmem:[%s1 + $0x58] sm:$0xff]
    %v85 = vld [vmem:[%s1 + $0x60] sm:$0xff]
    %v86 = vld [vmem:[%s1 + $0x68] sm:$0xff]
    %v87 = vld [vmem:[%s1 + $0x70] sm:$0xff]
    %v88 = vld [vmem:[%s1 + $0x78] sm:$0xff]
    %89 = vmatpush.msra.mxu0 %v88
    %90 = vmatpush.msra.mxu0 %v87
    %91 = vmatpush.msra.mxu0 %v86
    %92 = vmatpush.msra.mxu0 %v85
    %93 = vmatpush.msra.mxu0 %v84
    %94 = vmatpush.msra.mxu0 %v83
    %95 = vmatpush.msra.mxu0 %v82
    %96 = vmatpush.msra.mxu0 %v81
    %97 = vmatpush.msra.mxu0 %v80
    %98 = vmatpush.msra.mxu0 %v79
    %99 = vmatpush.msra.mxu0 %v78
    %100 = vmatpush.msra.mxu0 %v77
    %101 = vmatpush.msra.mxu0 %v76
    %102 = vmatpush.msra.mxu0 %v75
    %103 = vmatpush.msra.mxu0 %v74
    %104 = vmatpush.msra.mxu0 %v73
    %105 = vmatmul.f32.gmra.mxu0 %v69
    %v106 = vpop.f32.mrf.mxu0
    %v107 = vadd.f32 0.0, %v106
    %108 = vmatmul.f32.gmra.mxu0 %v70
    %v109 = vpop.f32.mrf.mxu0
    %v110 = vadd.f32 0.0, %v109
    %111 = vmatmul.f32.gmra.mxu0 %v71
    %v112 = vpop.f32.mrf.mxu0
    %v113 = vadd.f32 0.0, %v112
    %114 = vmatmul.f32.gmra.mxu0 %v72
    %v115 = vpop.f32.mrf.mxu0
    %v116 = vadd.f32 0.0, %v115
    %117 = vdwg.mxu0
    %v118 = vlaneseq
    %v119 = vshrl.u32 %v118, 7
    %v120 = vadd.s32 %v119, 8
    %v121 = vadd.s32 %v119, 16
    %v122 = vadd.s32 %v119, 24
    %v123 = vand.u32 %v119, 15
    %v124 = vand.u32 %v120, 15
    %v125 = vand.u32 %v121, 15
    %v126 = vand.u32 %v122, 15
    %vm127 = vcmp.eq.s32.totalorder %v123, 0
    %vm128 = vcmp.eq.s32.totalorder %v124, 0
    %vm129 = vcmp.eq.s32.totalorder %v125, 0
    %vm130 = vcmp.eq.s32.totalorder %v126, 0
    %vm131 = vcmp.eq.s32.totalorder %v123, 15
    %vm132 = vcmp.eq.s32.totalorder %v124, 15
    %vm133 = vcmp.eq.s32.totalorder %v125, 15
    %vm134 = vcmp.eq.s32.totalorder %v126, 15
    %v135 = vrot.slane %v107, 7
    %v136 = vrot.slane %v110, 7
    %v137 = vrot.slane %v113, 7
    %v138 = vrot.slane %v116, 7
    %vm139 = vcmp.lt.s32.totalorder %v119, 1
    %v140 = vsel %vm139, %v137, %v138
    %v141 = vsel %vm139, %v136, %v137
    %v142 = vsel %vm139, %v135, %v136
    %v143 = vsel %vm139, %v138, %v135
    %v144 = vsel %vm127, 1, 0
    %v145 = vsel %vm128, 1, 0
    %v146 = vsel %vm129, 1, 0
    %v147 = vsel %vm130, 1, 0
    %vm148 = vcmp.eq.s32.totalorder %v144, 1
    %vm149 = vcmp.eq.s32.totalorder %v145, 1
    %vm150 = vcmp.eq.s32.totalorder %v146, 1
    %vm151 = vcmp.eq.s32.totalorder %v147, 1
    %v152 = vsel %vm148, 0.0, %v143
    %v153 = vsel %vm149, 0.0, %v142
    %v154 = vsel %vm150, 0.0, %v141
    %v155 = vsel %vm151, 0.0, %v140
    %v156 = vrot.slane %v107, 1
    %v157 = vrot.slane %v110, 1
    %v158 = vrot.slane %v113, 1
    %v159 = vrot.slane %v116, 1
    %vm160 = vcmp.lt.s32.totalorder %v119, 7
    %v161 = vsel %vm160, %v158, %v159
    %v162 = vsel %vm160, %v157, %v158
    %v163 = vsel %vm160, %v156, %v157
    %v164 = vsel %vm160, %v159, %v156
    %v165 = vsel %vm131, 1, 0
    %v166 = vsel %vm132, 1, 0
    %v167 = vsel %vm133, 1, 0
    %v168 = vsel %vm134, 1, 0
    %vm169 = vcmp.eq.s32.totalorder %v165, 1
    %vm170 = vcmp.eq.s32.totalorder %v166, 1
    %vm171 = vcmp.eq.s32.totalorder %v167, 1
    %vm172 = vcmp.eq.s32.totalorder %v168, 1
    %v173 = vsel %vm169, 0.0, %v163
    %v174 = vsel %vm170, 0.0, %v162
    %v175 = vsel %vm171, 0.0, %v161
    %v176 = vsel %vm172, 0.0, %v164
    %v177 = vpack.c.bf16 %v153, %v152
    %v178 = vpack.c.bf16 %v155, %v154
    %v179 = vld [vmem:[%s2] sm:$0xf]
    %v180 = vld [vmem:[%s2 + $0x4] sm:$0xf]
    %v181 = vld [vmem:[%s2 + $0x8] sm:$0xf]
    %v182 = vld [vmem:[%s2 + $0xc] sm:$0xf]
    %v183 = vpack.c.bf16 %v110, %v107
    %v184 = vpack.c.bf16 %v116, %v113
    %s185 = scalar_lea.vmem %s2, 16
    %v186 = vld [vmem:[%s185] sm:$0xf]
    %v187 = vld [vmem:[%s185 + $0x4] sm:$0xf]
    %v188 = vld [vmem:[%s185 + $0x8] sm:$0xf]
    %v189 = vld [vmem:[%s185 + $0xc] sm:$0xf]
    %v194 = vunpack.c.l.b16 %v186
    %v195 = vunpack.c.l.b16 %v187
    %v196 = vunpack.c.l.b16 %v188
    %v197 = vunpack.c.l.b16 %v189
    %v198 = vpack.c.b16 %v195, %v194
    %v199 = vpack.c.b16 %v197, %v196
    %vm202 = vcmask 261120
    %v204 = vsel %vm202, %v183, 0
    %v207 = vsel %vm202, %v184, 0
    %209 = vmatpush.bf16.msra.mxu0 0
    %210 = vmatpush.bf16.msra.mxu0 0
    %211 = vmatpush.bf16.msra.mxu0 0
    %212 = vmatpush.bf16.msra.mxu0 0
    %213 = vmatpush.bf16.msra.mxu0 0
    %214 = vmatpush.bf16.msra.mxu0 0
    %215 = vmatpush.bf16.msra.mxu0 %v199
    %216 = vmatpush.bf16.msra.mxu0 %v198
    %217 = vmatmul.bf16.gmra.mxu0 %v204
    %v218 = vpop.f32.mrf.mxu0
    %v219 = vadd.f32 0.0, %v218
    %v220 = vpop.f32.mrf.mxu0
    %v221 = vadd.f32 0.0, %v220
    %222 = vmatmul.bf16.gmra.mxu0 %v207
    %v223 = vpop.f32.mrf.mxu0
    %v224 = vadd.f32 0.0, %v223
    %v225 = vpop.f32.mrf.mxu0
    %v226 = vadd.f32 0.0, %v225
    %227 = vdwg.mxu0
    %v232 = vunpack.c.l.b16 %v179
    %v233 = vunpack.c.l.b16 %v180
    %v234 = vunpack.c.l.b16 %v181
    %v235 = vunpack.c.l.b16 %v182
    %v236 = vpack.c.b16 %v233, %v232
    %v237 = vpack.c.b16 %v235, %v234
    %v241 = vsel %vm202, %v177, 0
    %v244 = vsel %vm202, %v178, 0
    %246 = vmatpush.bf16.msra.mxu0 0
    %247 = vmatpush.bf16.msra.mxu0 0
    %248 = vmatpush.bf16.msra.mxu0 0
    %249 = vmatpush.bf16.msra.mxu0 0
    %250 = vmatpush.bf16.msra.mxu0 0
    %251 = vmatpush.bf16.msra.mxu0 0
    %252 = vmatpush.bf16.msra.mxu0 %v237
    %253 = vmatpush.bf16.msra.mxu0 %v236
    %254 = vmatmul.bf16.gmra.mxu0 %v241
    %v255 = vpop.f32.mrf.mxu0
    %v256 = vadd.f32 %v219, %v255
    %v257 = vpop.f32.mrf.mxu0
    %v258 = vadd.f32 %v221, %v257
    %259 = vmatmul.bf16.gmra.mxu0 %v244
    %v260 = vpop.f32.mrf.mxu0
    %v261 = vadd.f32 %v224, %v260
    %v262 = vpop.f32.mrf.mxu0
    %v263 = vadd.f32 %v226, %v262
    %264 = vdwg.mxu0
    %v265 = vpack.c.bf16 %v174, %v173
    %v266 = vpack.c.bf16 %v176, %v175
    %s267 = scalar_lea.vmem %s2, 32
    %v268 = vld [vmem:[%s267] sm:$0xf]
    %v269 = vld [vmem:[%s267 + $0x4] sm:$0xf]
    %v270 = vld [vmem:[%s267 + $0x8] sm:$0xf]
    %v271 = vld [vmem:[%s267 + $0xc] sm:$0xf]
    %v276 = vunpack.c.l.b16 %v268
    %v277 = vunpack.c.l.b16 %v269
    %v278 = vunpack.c.l.b16 %v270
    %v279 = vunpack.c.l.b16 %v271
    %v280 = vpack.c.b16 %v277, %v276
    %v281 = vpack.c.b16 %v279, %v278
    %v285 = vsel %vm202, %v265, 0
    %v288 = vsel %vm202, %v266, 0
    %290 = vmatpush.bf16.msra.mxu0 0
    %291 = vmatpush.bf16.msra.mxu0 0
    %292 = vmatpush.bf16.msra.mxu0 0
    %293 = vmatpush.bf16.msra.mxu0 0
    %294 = vmatpush.bf16.msra.mxu0 0
    %295 = vmatpush.bf16.msra.mxu0 0
    %296 = vmatpush.bf16.msra.mxu0 %v281
    %297 = vmatpush.bf16.msra.mxu0 %v280
    %298 = vmatmul.bf16.gmra.mxu0 %v285
    %v299 = vpop.f32.mrf.mxu0
    %v300 = vadd.f32 0.0, %v299
    %v301 = vpop.f32.mrf.mxu0
    %v302 = vadd.f32 0.0, %v301
    %303 = vmatmul.bf16.gmra.mxu0 %v288
    %v304 = vpop.f32.mrf.mxu0
    %v305 = vadd.f32 0.0, %v304
    %v306 = vpop.f32.mrf.mxu0
    %v307 = vadd.f32 0.0, %v306
    %308 = vdwg.mxu0
    %v309 = vadd.f32 %v256, %v300
    %v310 = vadd.f32 %v258, %v302
    %v311 = vadd.f32 %v261, %v305
    %v312 = vadd.f32 %v263, %v307
    %v313 = vld [vmem:[%s3] sm:$0x1]
    %v315 = vperm.slane %v313, 0
    %v317 = vadd.f32 %v309, %v315
    %v318 = vadd.f32 %v310, %v315
    %v319 = vadd.f32 %v311, %v315
    %v320 = vadd.f32 %v312, %v315
    %v321 = vmax.f32 %v317, 0.0
    %v322 = vmax.f32 %v318, 0.0
    %v323 = vmax.f32 %v319, 0.0
    %v324 = vmax.f32 %v320, 0.0
    %v325 = vrot.slane %v321, 7
    %v326 = vrot.slane %v322, 7
    %v327 = vrot.slane %v323, 7
    %v328 = vrot.slane %v324, 7
    %v329 = vsel %vm139, %v327, %v328
    %v330 = vsel %vm139, %v326, %v327
    %v331 = vsel %vm139, %v325, %v326
    %v332 = vsel %vm139, %v328, %v325
    %v333 = vsel %vm148, 0.0, %v332
    %v334 = vsel %vm149, 0.0, %v331
    %v335 = vsel %vm150, 0.0, %v330
    %v336 = vsel %vm151, 0.0, %v329
    %v337 = vrot.slane %v321, 1
    %v338 = vrot.slane %v322, 1
    %v339 = vrot.slane %v323, 1
    %v340 = vrot.slane %v324, 1
    %v341 = vsel %vm160, %v339, %v340
    %v342 = vsel %vm160, %v338, %v339
    %v343 = vsel %vm160, %v337, %v338
    %v344 = vsel %vm160, %v340, %v337
    %v345 = vsel %vm169, 0.0, %v343
    %v346 = vsel %vm170, 0.0, %v342
    %v347 = vsel %vm171, 0.0, %v341
    %v348 = vsel %vm172, 0.0, %v344
    %v349 = vpack.c.bf16 %v334, %v333
    %v350 = vpack.c.bf16 %v336, %v335
    %v351 = vld [vmem:[%s4] sm:$0xff]
    %v352 = vld [vmem:[%s4 + $0x8] sm:$0xff]
    %v353 = vld [vmem:[%s4 + $0x10] sm:$0xff]
    %v354 = vld [vmem:[%s4 + $0x18] sm:$0xff]
    %v355 = vld [vmem:[%s4 + $0x20] sm:$0xff]
    %v356 = vld [vmem:[%s4 + $0x28] sm:$0xff]
    %v357 = vld [vmem:[%s4 + $0x30] sm:$0xff]
    %v358 = vld [vmem:[%s4 + $0x38] sm:$0xff]
    %v359 = vld [vmem:[%s4 + $0x40] sm:$0xff]
    %v360 = vld [vmem:[%s4 + $0x48] sm:$0xff]
    %v361 = vld [vmem:[%s4 + $0x50] sm:$0xff]
    %v362 = vld [vmem:[%s4 + $0x58] sm:$0xff]
    %v363 = vld [vmem:[%s4 + $0x60] sm:$0xff]
    %v364 = vld [vmem:[%s4 + $0x68] sm:$0xff]
    %v365 = vld [vmem:[%s4 + $0x70] sm:$0xff]
    %v366 = vld [vmem:[%s4 + $0x78] sm:$0xff]
    %v367 = vpack.c.bf16 %v322, %v321
    %v368 = vpack.c.bf16 %v324, %v323
    %s369 = scalar_lea.vmem %s4, 128
    %v370 = vld [vmem:[%s369] sm:$0xff]
    %v371 = vld [vmem:[%s369 + $0x8] sm:$0xff]
    %v372 = vld [vmem:[%s369 + $0x10] sm:$0xff]
    %v373 = vld [vmem:[%s369 + $0x18] sm:$0xff]
    %v374 = vld [vmem:[%s369 + $0x20] sm:$0xff]
    %v375 = vld [vmem:[%s369 + $0x28] sm:$0xff]
    %v376 = vld [vmem:[%s369 + $0x30] sm:$0xff]
    %v377 = vld [vmem:[%s369 + $0x38] sm:$0xff]
    %v378 = vld [vmem:[%s369 + $0x40] sm:$0xff]
    %v379 = vld [vmem:[%s369 + $0x48] sm:$0xff]
    %v380 = vld [vmem:[%s369 + $0x50] sm:$0xff]
    %v381 = vld [vmem:[%s369 + $0x58] sm:$0xff]
    %v382 = vld [vmem:[%s369 + $0x60] sm:$0xff]
    %v383 = vld [vmem:[%s369 + $0x68] sm:$0xff]
    %v384 = vld [vmem:[%s369 + $0x70] sm:$0xff]
    %v385 = vld [vmem:[%s369 + $0x78] sm:$0xff]
    %v402 = vunpack.c.l.b16 %v370
    %v403 = vunpack.c.h.b16 %v370
    %v404 = vunpack.c.l.b16 %v371
    %v405 = vunpack.c.h.b16 %v371
    %v406 = vunpack.c.l.b16 %v372
    %v407 = vunpack.c.h.b16 %v372
    %v408 = vunpack.c.l.b16 %v373
    %v409 = vunpack.c.h.b16 %v373
    %v410 = vunpack.c.l.b16 %v374
    %v411 = vunpack.c.h.b16 %v374
    %v412 = vunpack.c.l.b16 %v375
    %v413 = vunpack.c.h.b16 %v375
    %v414 = vunpack.c.l.b16 %v376
    %v415 = vunpack.c.h.b16 %v376
    %v416 = vunpack.c.l.b16 %v377
    %v417 = vunpack.c.h.b16 %v377
    %v418 = vunpack.c.l.b16 %v378
    %v419 = vunpack.c.h.b16 %v378
    %v420 = vunpack.c.l.b16 %v379
    %v421 = vunpack.c.h.b16 %v379
    %v422 = vunpack.c.l.b16 %v380
    %v423 = vunpack.c.h.b16 %v380
    %v424 = vunpack.c.l.b16 %v381
    %v425 = vunpack.c.h.b16 %v381
    %v426 = vunpack.c.l.b16 %v382
    %v427 = vunpack.c.h.b16 %v382
    %v428 = vunpack.c.l.b16 %v383
    %v429 = vunpack.c.h.b16 %v383
    %v430 = vunpack.c.l.b16 %v384
    %v431 = vunpack.c.h.b16 %v384
    %v432 = vunpack.c.l.b16 %v385
    %v433 = vunpack.c.h.b16 %v385
    %v434 = vpack.c.b16 %v404, %v402
    %v435 = vpack.c.b16 %v405, %v403
    %v436 = vpack.c.b16 %v408, %v406
    %v437 = vpack.c.b16 %v409, %v407
    %v438 = vpack.c.b16 %v412, %v410
    %v439 = vpack.c.b16 %v413, %v411
    %v440 = vpack.c.b16 %v416, %v414
    %v441 = vpack.c.b16 %v417, %v415
    %v442 = vpack.c.b16 %v420, %v418
    %v443 = vpack.c.b16 %v421, %v419
    %v444 = vpack.c.b16 %v424, %v422
    %v445 = vpack.c.b16 %v425, %v423
    %v446 = vpack.c.b16 %v428, %v426
    %v447 = vpack.c.b16 %v429, %v427
    %v448 = vpack.c.b16 %v432, %v430
    %v449 = vpack.c.b16 %v433, %v431
    %466 = vmatpush.bf16.msra.mxu0 %v448
    %467 = vmatpush.bf16.msra.mxu0 %v446
    %468 = vmatpush.bf16.msra.mxu0 %v444
    %469 = vmatpush.bf16.msra.mxu0 %v442
    %470 = vmatpush.bf16.msra.mxu0 %v440
    %471 = vmatpush.bf16.msra.mxu0 %v438
    %472 = vmatpush.bf16.msra.mxu0 %v436
    %473 = vmatpush.bf16.msra.mxu0 %v434
    %474 = vmatmul.bf16.gmra.mxu0 %v367
    %v475 = vpop.f32.mrf.mxu0
    %v476 = vadd.f32 0.0, %v475
    %v477 = vpop.f32.mrf.mxu0
    %v478 = vadd.f32 0.0, %v477
    %479 = vmatmul.bf16.gmra.mxu0 %v368
    %v480 = vpop.f32.mrf.mxu0
    %v481 = vadd.f32 0.0, %v480
    %v482 = vpop.f32.mrf.mxu0
    %v483 = vadd.f32 0.0, %v482
    %484 = vdwg.mxu0
    %485 = vmatpush.bf16.msra.mxu0 %v449
    %486 = vmatpush.bf16.msra.mxu0 %v447
    %487 = vmatpush.bf16.msra.mxu0 %v445
    %488 = vmatpush.bf16.msra.mxu0 %v443
    %489 = vmatpush.bf16.msra.mxu0 %v441
    %490 = vmatpush.bf16.msra.mxu0 %v439
    %491 = vmatpush.bf16.msra.mxu0 %v437
    %492 = vmatpush.bf16.msra.mxu0 %v435
    %493 = vmatmul.bf16.gmra.mxu0 %v367
    %v494 = vpop.f32.mrf.mxu0
    %v495 = vadd.f32 0.0, %v494
    %v496 = vpop.f32.mrf.mxu0
    %v497 = vadd.f32 0.0, %v496
    %498 = vmatmul.bf16.gmra.mxu0 %v368
    %v499 = vpop.f32.mrf.mxu0
    %v500 = vadd.f32 0.0, %v499
    %v501 = vpop.f32.mrf.mxu0
    %v502 = vadd.f32 0.0, %v501
    %503 = vdwg.mxu0
    %v520 = vunpack.c.l.b16 %v351
    %v521 = vunpack.c.h.b16 %v351
    %v522 = vunpack.c.l.b16 %v352
    %v523 = vunpack.c.h.b16 %v352
    %v524 = vunpack.c.l.b16 %v353
    %v525 = vunpack.c.h.b16 %v353
    %v526 = vunpack.c.l.b16 %v354
    %v527 = vunpack.c.h.b16 %v354
    %v528 = vunpack.c.l.b16 %v355
    %v529 = vunpack.c.h.b16 %v355
    %v530 = vunpack.c.l.b16 %v356
    %v531 = vunpack.c.h.b16 %v356
    %v532 = vunpack.c.l.b16 %v357
    %v533 = vunpack.c.h.b16 %v357
    %v534 = vunpack.c.l.b16 %v358
    %v535 = vunpack.c.h.b16 %v358
    %v536 = vunpack.c.l.b16 %v359
    %v537 = vunpack.c.h.b16 %v359
    %v538 = vunpack.c.l.b16 %v360
    %v539 = vunpack.c.h.b16 %v360
    %v540 = vunpack.c.l.b16 %v361
    %v541 = vunpack.c.h.b16 %v361
    %v542 = vunpack.c.l.b16 %v362
    %v543 = vunpack.c.h.b16 %v362
    %v544 = vunpack.c.l.b16 %v363
    %v545 = vunpack.c.h.b16 %v363
    %v546 = vunpack.c.l.b16 %v364
    %v547 = vunpack.c.h.b16 %v364
    %v548 = vunpack.c.l.b16 %v365
    %v549 = vunpack.c.h.b16 %v365
    %v550 = vunpack.c.l.b16 %v366
    %v551 = vunpack.c.h.b16 %v366
    %v552 = vpack.c.b16 %v522, %v520
    %v553 = vpack.c.b16 %v523, %v521
    %v554 = vpack.c.b16 %v526, %v524
    %v555 = vpack.c.b16 %v527, %v525
    %v556 = vpack.c.b16 %v530, %v528
    %v557 = vpack.c.b16 %v531, %v529
    %v558 = vpack.c.b16 %v534, %v532
    %v559 = vpack.c.b16 %v535, %v533
    %v560 = vpack.c.b16 %v538, %v536
    %v561 = vpack.c.b16 %v539, %v537
    %v562 = vpack.c.b16 %v542, %v540
    %v563 = vpack.c.b16 %v543, %v541
    %v564 = vpack.c.b16 %v546, %v544
    %v565 = vpack.c.b16 %v547, %v545
    %v566 = vpack.c.b16 %v550, %v548
    %v567 = vpack.c.b16 %v551, %v549
    %584 = vmatpush.bf16.msra.mxu0 %v566
    %585 = vmatpush.bf16.msra.mxu0 %v564
    %586 = vmatpush.bf16.msra.mxu0 %v562
    %587 = vmatpush.bf16.msra.mxu0 %v560
    %588 = vmatpush.bf16.msra.mxu0 %v558
    %589 = vmatpush.bf16.msra.mxu0 %v556
    %590 = vmatpush.bf16.msra.mxu0 %v554
    %591 = vmatpush.bf16.msra.mxu0 %v552
    %592 = vmatmul.bf16.gmra.mxu0 %v349
    %v593 = vpop.f32.mrf.mxu0
    %v594 = vadd.f32 %v476, %v593
    %v595 = vpop.f32.mrf.mxu0
    %v596 = vadd.f32 %v478, %v595
    %597 = vmatmul.bf16.gmra.mxu0 %v350
    %v598 = vpop.f32.mrf.mxu0
    %v599 = vadd.f32 %v481, %v598
    %v600 = vpop.f32.mrf.mxu0
    %v601 = vadd.f32 %v483, %v600
    %602 = vdwg.mxu0
    %603 = vmatpush.bf16.msra.mxu0 %v567
    %604 = vmatpush.bf16.msra.mxu0 %v565
    %605 = vmatpush.bf16.msra.mxu0 %v563
    %606 = vmatpush.bf16.msra.mxu0 %v561
    %607 = vmatpush.bf16.msra.mxu0 %v559
    %608 = vmatpush.bf16.msra.mxu0 %v557
    %609 = vmatpush.bf16.msra.mxu0 %v555
    %610 = vmatpush.bf16.msra.mxu0 %v553
    %611 = vmatmul.bf16.gmra.mxu0 %v349
    %v612 = vpop.f32.mrf.mxu0
    %v613 = vadd.f32 %v495, %v612
    %v614 = vpop.f32.mrf.mxu0
    %v615 = vadd.f32 %v497, %v614
    %616 = vmatmul.bf16.gmra.mxu0 %v350
    %v617 = vpop.f32.mrf.mxu0
    %v618 = vadd.f32 %v500, %v617
    %v619 = vpop.f32.mrf.mxu0
    %v620 = vadd.f32 %v502, %v619
    %621 = vdwg.mxu0
    %v622 = vpack.c.bf16 %v346, %v345
    %v623 = vpack.c.bf16 %v348, %v347
    %s624 = scalar_lea.vmem %s4, 256
    %v625 = vld [vmem:[%s624] sm:$0xff]
    %v626 = vld [vmem:[%s624 + $0x8] sm:$0xff]
    %v627 = vld [vmem:[%s624 + $0x10] sm:$0xff]
    %v628 = vld [vmem:[%s624 + $0x18] sm:$0xff]
    %v629 = vld [vmem:[%s624 + $0x20] sm:$0xff]
    %v630 = vld [vmem:[%s624 + $0x28] sm:$0xff]
    %v631 = vld [vmem:[%s624 + $0x30] sm:$0xff]
    %v632 = vld [vmem:[%s624 + $0x38] sm:$0xff]
    %v633 = vld [vmem:[%s624 + $0x40] sm:$0xff]
    %v634 = vld [vmem:[%s624 + $0x48] sm:$0xff]
    %v635 = vld [vmem:[%s624 + $0x50] sm:$0xff]
    %v636 = vld [vmem:[%s624 + $0x58] sm:$0xff]
    %v637 = vld [vmem:[%s624 + $0x60] sm:$0xff]
    %v638 = vld [vmem:[%s624 + $0x68] sm:$0xff]
    %v639 = vld [vmem:[%s624 + $0x70] sm:$0xff]
    %v640 = vld [vmem:[%s624 + $0x78] sm:$0xff]
    %v657 = vunpack.c.l.b16 %v625
    %v658 = vunpack.c.h.b16 %v625
    %v659 = vunpack.c.l.b16 %v626
    %v660 = vunpack.c.h.b16 %v626
    %v661 = vunpack.c.l.b16 %v627
    %v662 = vunpack.c.h.b16 %v627
    %v663 = vunpack.c.l.b16 %v628
    %v664 = vunpack.c.h.b16 %v628
    %v665 = vunpack.c.l.b16 %v629
    %v666 = vunpack.c.h.b16 %v629
    %v667 = vunpack.c.l.b16 %v630
    %v668 = vunpack.c.h.b16 %v630
    %v669 = vunpack.c.l.b16 %v631
    %v670 = vunpack.c.h.b16 %v631
    %v671 = vunpack.c.l.b16 %v632
    %v672 = vunpack.c.h.b16 %v632
    %v673 = vunpack.c.l.b16 %v633
    %v674 = vunpack.c.h.b16 %v633
    %v675 = vunpack.c.l.b16 %v634
    %v676 = vunpack.c.h.b16 %v634
    %v677 = vunpack.c.l.b16 %v635
    %v678 = vunpack.c.h.b16 %v635
    %v679 = vunpack.c.l.b16 %v636
    %v680 = vunpack.c.h.b16 %v636
    %v681 = vunpack.c.l.b16 %v637
    %v682 = vunpack.c.h.b16 %v637
    %v683 = vunpack.c.l.b16 %v638
    %v684 = vunpack.c.h.b16 %v638
    %v685 = vunpack.c.l.b16 %v639
    %v686 = vunpack.c.h.b16 %v639
    %v687 = vunpack.c.l.b16 %v640
    %v688 = vunpack.c.h.b16 %v640
    %v689 = vpack.c.b16 %v659, %v657
    %v690 = vpack.c.b16 %v660, %v658
    %v691 = vpack.c.b16 %v663, %v661
    %v692 = vpack.c.b16 %v664, %v662
    %v693 = vpack.c.b16 %v667, %v665
    %v694 = vpack.c.b16 %v668, %v666
    %v695 = vpack.c.b16 %v671, %v669
    %v696 = vpack.c.b16 %v672, %v670
    %v697 = vpack.c.b16 %v675, %v673
    %v698 = vpack.c.b16 %v676, %v674
    %v699 = vpack.c.b16 %v679, %v677
    %v700 = vpack.c.b16 %v680, %v678
    %v701 = vpack.c.b16 %v683, %v681
    %v702 = vpack.c.b16 %v684, %v682
    %v703 = vpack.c.b16 %v687, %v685
    %v704 = vpack.c.b16 %v688, %v686
    %721 = vmatpush.bf16.msra.mxu0 %v703
    %722 = vmatpush.bf16.msra.mxu0 %v701
    %723 = vmatpush.bf16.msra.mxu0 %v699
    %724 = vmatpush.bf16.msra.mxu0 %v697
    %725 = vmatpush.bf16.msra.mxu0 %v695
    %726 = vmatpush.bf16.msra.mxu0 %v693
    %727 = vmatpush.bf16.msra.mxu0 %v691
    %728 = vmatpush.bf16.msra.mxu0 %v689
    %729 = vmatmul.bf16.gmra.mxu0 %v622
    %v730 = vpop.f32.mrf.mxu0
    %v731 = vadd.f32 0.0, %v730
    %v732 = vpop.f32.mrf.mxu0
    %v733 = vadd.f32 0.0, %v732
    %734 = vmatmul.bf16.gmra.mxu0 %v623
    %v735 = vpop.f32.mrf.mxu0
    %v736 = vadd.f32 0.0, %v735
    %v737 = vpop.f32.mrf.mxu0
    %v738 = vadd.f32 0.0, %v737
    %739 = vdwg.mxu0
    %740 = vmatpush.bf16.msra.mxu0 %v704
    %741 = vmatpush.bf16.msra.mxu0 %v702
    %742 = vmatpush.bf16.msra.mxu0 %v700
    %743 = vmatpush.bf16.msra.mxu0 %v698
    %744 = vmatpush.bf16.msra.mxu0 %v696
    %745 = vmatpush.bf16.msra.mxu0 %v694
    %746 = vmatpush.bf16.msra.mxu0 %v692
    %747 = vmatpush.bf16.msra.mxu0 %v690
    %748 = vmatmul.bf16.gmra.mxu0 %v622
    %v749 = vpop.f32.mrf.mxu0
    %v750 = vadd.f32 0.0, %v749
    %v751 = vpop.f32.mrf.mxu0
    %v752 = vadd.f32 0.0, %v751
    %753 = vmatmul.bf16.gmra.mxu0 %v623
    %v754 = vpop.f32.mrf.mxu0
    %v755 = vadd.f32 0.0, %v754
    %v756 = vpop.f32.mrf.mxu0
    %v757 = vadd.f32 0.0, %v756
    %758 = vdwg.mxu0
    %v759 = vadd.f32 %v594, %v731
    %v760 = vadd.f32 %v613, %v750
    %v761 = vadd.f32 %v596, %v733
    %v762 = vadd.f32 %v615, %v752
    %v763 = vadd.f32 %v599, %v736
    %v764 = vadd.f32 %v618, %v755
    %v765 = vadd.f32 %v601, %v738
    %v766 = vadd.f32 %v620, %v757
    %v767 = vld [vmem:[%s5] sm:$0x3]
    %v769 = vperm.slane %v767, 0
    %v770 = vperm.slane %v767, 1
    %v773 = vadd.f32 %v759, %v769
    %v774 = vadd.f32 %v760, %v770
    %v775 = vadd.f32 %v761, %v769
    %v776 = vadd.f32 %v762, %v770
    %v777 = vadd.f32 %v763, %v769
    %v778 = vadd.f32 %v764, %v770
    %v779 = vadd.f32 %v765, %v769
    %v780 = vadd.f32 %v766, %v770
    %v781 = vmax.f32 %v773, 0.0
    %v782 = vmax.f32 %v774, 0.0
    %v783 = vmax.f32 %v775, 0.0
    %v784 = vmax.f32 %v776, 0.0
    %v785 = vmax.f32 %v777, 0.0
    %v786 = vmax.f32 %v778, 0.0
    %v787 = vmax.f32 %v779, 0.0
    %v788 = vmax.f32 %v780, 0.0
    %v789 = vrot.slane %v781, 7
    %v790 = vrot.slane %v782, 7
    %v791 = vrot.slane %v783, 7
    %v792 = vrot.slane %v784, 7
    %v793 = vrot.slane %v785, 7
    %v794 = vrot.slane %v786, 7
    %v795 = vrot.slane %v787, 7
    %v796 = vrot.slane %v788, 7
    %v797 = vsel %vm139, %v793, %v795
    %v798 = vsel %vm139, %v794, %v796
    %v799 = vsel %vm139, %v791, %v793
    %v800 = vsel %vm139, %v792, %v794
    %v801 = vsel %vm139, %v789, %v791
    %v802 = vsel %vm139, %v790, %v792
    %v803 = vsel %vm139, %v795, %v789
    %v804 = vsel %vm139, %v796, %v790
    %v805 = vsel %vm148, 0.0, %v803
    %v806 = vsel %vm148, 0.0, %v804
    %v807 = vsel %vm149, 0.0, %v801
    %v808 = vsel %vm149, 0.0, %v802
    %v809 = vsel %vm150, 0.0, %v799
    %v810 = vsel %vm150, 0.0, %v800
    %v811 = vsel %vm151, 0.0, %v797
    %v812 = vsel %vm151, 0.0, %v798
    %v813 = vrot.slane %v781, 1
    %v814 = vrot.slane %v782, 1
    %v815 = vrot.slane %v783, 1
    %v816 = vrot.slane %v784, 1
    %v817 = vrot.slane %v785, 1
    %v818 = vrot.slane %v786, 1
    %v819 = vrot.slane %v787, 1
    %v820 = vrot.slane %v788, 1
    %v821 = vsel %vm160, %v817, %v819
    %v822 = vsel %vm160, %v818, %v820
    %v823 = vsel %vm160, %v815, %v817
    %v824 = vsel %vm160, %v816, %v818
    %v825 = vsel %vm160, %v813, %v815
    %v826 = vsel %vm160, %v814, %v816
    %v827 = vsel %vm160, %v819, %v813
    %v828 = vsel %vm160, %v820, %v814
    %v829 = vsel %vm169, 0.0, %v825
    %v830 = vsel %vm169, 0.0, %v826
    %v831 = vsel %vm170, 0.0, %v823
    %v832 = vsel %vm170, 0.0, %v824
    %v833 = vsel %vm171, 0.0, %v821
    %v834 = vsel %vm171, 0.0, %v822
    %v835 = vsel %vm172, 0.0, %v827
    %v836 = vsel %vm172, 0.0, %v828
    %v837 = vpack.c.bf16 %v807, %v805
    %v838 = vpack.c.bf16 %v808, %v806
    %v839 = vpack.c.bf16 %v811, %v809
    %v840 = vpack.c.bf16 %v812, %v810
    %v841 = vld [vmem:[%s6] sm:$0xff]
    %v842 = vld [vmem:[%s6 + $0x8] sm:$0xff]
    %v843 = vld [vmem:[%s6 + $0x10] sm:$0xff]
    %v844 = vld [vmem:[%s6 + $0x18] sm:$0xff]
    %v845 = vld [vmem:[%s6 + $0x20] sm:$0xff]
    %v846 = vld [vmem:[%s6 + $0x28] sm:$0xff]
    %v847 = vld [vmem:[%s6 + $0x30] sm:$0xff]
    %v848 = vld [vmem:[%s6 + $0x38] sm:$0xff]
    %v849 = vld [vmem:[%s6 + $0x40] sm:$0xff]
    %v850 = vld [vmem:[%s6 + $0x48] sm:$0xff]
    %v851 = vld [vmem:[%s6 + $0x50] sm:$0xff]
    %v852 = vld [vmem:[%s6 + $0x58] sm:$0xff]
    %v853 = vld [vmem:[%s6 + $0x60] sm:$0xff]
    %v854 = vld [vmem:[%s6 + $0x68] sm:$0xff]
    %v855 = vld [vmem:[%s6 + $0x70] sm:$0xff]
    %v856 = vld [vmem:[%s6 + $0x78] sm:$0xff]
    %v857 = vld [vmem:[%s6 + $0x80] sm:$0xff]
    %v858 = vld [vmem:[%s6 + $0x88] sm:$0xff]
    %v859 = vld [vmem:[%s6 + $0x90] sm:$0xff]
    %v860 = vld [vmem:[%s6 + $0x98] sm:$0xff]
    %v861 = vld [vmem:[%s6 + $0xa0] sm:$0xff]
    %v862 = vld [vmem:[%s6 + $0xa8] sm:$0xff]
    %v863 = vld [vmem:[%s6 + $0xb0] sm:$0xff]
    %v864 = vld [vmem:[%s6 + $0xb8] sm:$0xff]
    %v865 = vld [vmem:[%s6 + $0xc0] sm:$0xff]
    %v866 = vld [vmem:[%s6 + $0xc8] sm:$0xff]
    %v867 = vld [vmem:[%s6 + $0xd0] sm:$0xff]
    %v868 = vld [vmem:[%s6 + $0xd8] sm:$0xff]
    %v869 = vld [vmem:[%s6 + $0xe0] sm:$0xff]
    %v870 = vld [vmem:[%s6 + $0xe8] sm:$0xff]
    %v871 = vld [vmem:[%s6 + $0xf0] sm:$0xff]
    %v872 = vld [vmem:[%s6 + $0xf8] sm:$0xff]
    %v873 = vld [vmem:[%s6 + $0x100] sm:$0xff]
    %v874 = vld [vmem:[%s6 + $0x108] sm:$0xff]
    %v875 = vld [vmem:[%s6 + $0x110] sm:$0xff]
    %v876 = vld [vmem:[%s6 + $0x118] sm:$0xff]
    %v877 = vld [vmem:[%s6 + $0x120] sm:$0xff]
    %v878 = vld [vmem:[%s6 + $0x128] sm:$0xff]
    %v879 = vld [vmem:[%s6 + $0x130] sm:$0xff]
    %v880 = vld [vmem:[%s6 + $0x138] sm:$0xff]
    %v881 = vld [vmem:[%s6 + $0x140] sm:$0xff]
    %v882 = vld [vmem:[%s6 + $0x148] sm:$0xff]
    %v883 = vld [vmem:[%s6 + $0x150] sm:$0xff]
    %v884 = vld [vmem:[%s6 + $0x158] sm:$0xff]
    %v885 = vld [vmem:[%s6 + $0x160] sm:$0xff]
    %v886 = vld [vmem:[%s6 + $0x168] sm:$0xff]
    %v887 = vld [vmem:[%s6 + $0x170] sm:$0xff]
    %v888 = vld [vmem:[%s6 + $0x178] sm:$0xff]
    %v889 = vld [vmem:[%s6 + $0x180] sm:$0xff]
    %v890 = vld [vmem:[%s6 + $0x188] sm:$0xff]
    %v891 = vld [vmem:[%s6 + $0x190] sm:$0xff]
    %v892 = vld [vmem:[%s6 + $0x198] sm:$0xff]
    %v893 = vld [vmem:[%s6 + $0x1a0] sm:$0xff]
    %v894 = vld [vmem:[%s6 + $0x1a8] sm:$0xff]
    %v895 = vld [vmem:[%s6 + $0x1b0] sm:$0xff]
    %v896 = vld [vmem:[%s6 + $0x1b8] sm:$0xff]
    %v897 = vld [vmem:[%s6 + $0x1c0] sm:$0xff]
    %v898 = vld [vmem:[%s6 + $0x1c8] sm:$0xff]
    %v899 = vld [vmem:[%s6 + $0x1d0] sm:$0xff]
    %v900 = vld [vmem:[%s6 + $0x1d8] sm:$0xff]
    %v901 = vld [vmem:[%s6 + $0x1e0] sm:$0xff]
    %v902 = vld [vmem:[%s6 + $0x1e8] sm:$0xff]
    %v903 = vld [vmem:[%s6 + $0x1f0] sm:$0xff]
    %v904 = vld [vmem:[%s6 + $0x1f8] sm:$0xff]
    %v905 = vpack.c.bf16 %v783, %v781
    %v906 = vpack.c.bf16 %v784, %v782
    %v907 = vpack.c.bf16 %v787, %v785
    %v908 = vpack.c.bf16 %v788, %v786
    %s909 = scalar_lea.vmem %s6, 512
    %v910 = vld [vmem:[%s909] sm:$0xff]
    %v911 = vld [vmem:[%s909 + $0x8] sm:$0xff]
    %v912 = vld [vmem:[%s909 + $0x10] sm:$0xff]
    %v913 = vld [vmem:[%s909 + $0x18] sm:$0xff]
    %v914 = vld [vmem:[%s909 + $0x20] sm:$0xff]
    %v915 = vld [vmem:[%s909 + $0x28] sm:$0xff]
    %v916 = vld [vmem:[%s909 + $0x30] sm:$0xff]
    %v917 = vld [vmem:[%s909 + $0x38] sm:$0xff]
    %v918 = vld [vmem:[%s909 + $0x40] sm:$0xff]
    %v919 = vld [vmem:[%s909 + $0x48] sm:$0xff]
    %v920 = vld [vmem:[%s909 + $0x50] sm:$0xff]
    %v921 = vld [vmem:[%s909 + $0x58] sm:$0xff]
    %v922 = vld [vmem:[%s909 + $0x60] sm:$0xff]
    %v923 = vld [vmem:[%s909 + $0x68] sm:$0xff]
    %v924 = vld [vmem:[%s909 + $0x70] sm:$0xff]
    %v925 = vld [vmem:[%s909 + $0x78] sm:$0xff]
    %v926 = vld [vmem:[%s909 + $0x80] sm:$0xff]
    %v927 = vld [vmem:[%s909 + $0x88] sm:$0xff]
    %v928 = vld [vmem:[%s909 + $0x90] sm:$0xff]
    %v929 = vld [vmem:[%s909 + $0x98] sm:$0xff]
    %v930 = vld [vmem:[%s909 + $0xa0] sm:$0xff]
    %v931 = vld [vmem:[%s909 + $0xa8] sm:$0xff]
    %v932 = vld [vmem:[%s909 + $0xb0] sm:$0xff]
    %v933 = vld [vmem:[%s909 + $0xb8] sm:$0xff]
    %v934 = vld [vmem:[%s909 + $0xc0] sm:$0xff]
    %v935 = vld [vmem:[%s909 + $0xc8] sm:$0xff]
    %v936 = vld [vmem:[%s909 + $0xd0] sm:$0xff]
    %v937 = vld [vmem:[%s909 + $0xd8] sm:$0xff]
    %v938 = vld [vmem:[%s909 + $0xe0] sm:$0xff]
    %v939 = vld [vmem:[%s909 + $0xe8] sm:$0xff]
    %v940 = vld [vmem:[%s909 + $0xf0] sm:$0xff]
    %v941 = vld [vmem:[%s909 + $0xf8] sm:$0xff]
    %v942 = vld [vmem:[%s909 + $0x100] sm:$0xff]
    %v943 = vld [vmem:[%s909 + $0x108] sm:$0xff]
    %v944 = vld [vmem:[%s909 + $0x110] sm:$0xff]
    %v945 = vld [vmem:[%s909 + $0x118] sm:$0xff]
    %v946 = vld [vmem:[%s909 + $0x120] sm:$0xff]
    %v947 = vld [vmem:[%s909 + $0x128] sm:$0xff]
    %v948 = vld [vmem:[%s909 + $0x130] sm:$0xff]
    %v949 = vld [vmem:[%s909 + $0x138] sm:$0xff]
    %v950 = vld [vmem:[%s909 + $0x140] sm:$0xff]
    %v951 = vld [vmem:[%s909 + $0x148] sm:$0xff]
    %v952 = vld [vmem:[%s909 + $0x150] sm:$0xff]
    %v953 = vld [vmem:[%s909 + $0x158] sm:$0xff]
    %v954 = vld [vmem:[%s909 + $0x160] sm:$0xff]
    %v955 = vld [vmem:[%s909 + $0x168] sm:$0xff]
    %v956 = vld [vmem:[%s909 + $0x170] sm:$0xff]
    %v957 = vld [vmem:[%s909 + $0x178] sm:$0xff]
    %v958 = vld [vmem:[%s909 + $0x180] sm:$0xff]
    %v959 = vld [vmem:[%s909 + $0x188] sm:$0xff]
    %v960 = vld [vmem:[%s909 + $0x190] sm:$0xff]
    %v961 = vld [vmem:[%s909 + $0x198] sm:$0xff]
    %v962 = vld [vmem:[%s909 + $0x1a0] sm:$0xff]
    %v963 = vld [vmem:[%s909 + $0x1a8] sm:$0xff]
    %v964 = vld [vmem:[%s909 + $0x1b0] sm:$0xff]
    %v965 = vld [vmem:[%s909 + $0x1b8] sm:$0xff]
    %v966 = vld [vmem:[%s909 + $0x1c0] sm:$0xff]
    %v967 = vld [vmem:[%s909 + $0x1c8] sm:$0xff]
    %v968 = vld [vmem:[%s909 + $0x1d0] sm:$0xff]
    %v969 = vld [vmem:[%s909 + $0x1d8] sm:$0xff]
    %v970 = vld [vmem:[%s909 + $0x1e0] sm:$0xff]
    %v971 = vld [vmem:[%s909 + $0x1e8] sm:$0xff]
    %v972 = vld [vmem:[%s909 + $0x1f0] sm:$0xff]
    %v973 = vld [vmem:[%s909 + $0x1f8] sm:$0xff]
    %v1038 = vunpack.c.l.b16 %v910
    %v1039 = vunpack.c.h.b16 %v910
    %v1040 = vunpack.c.l.b16 %v911
    %v1041 = vunpack.c.h.b16 %v911
    %v1042 = vunpack.c.l.b16 %v912
    %v1043 = vunpack.c.h.b16 %v912
    %v1044 = vunpack.c.l.b16 %v913
    %v1045 = vunpack.c.h.b16 %v913
    %v1046 = vunpack.c.l.b16 %v914
    %v1047 = vunpack.c.h.b16 %v914
    %v1048 = vunpack.c.l.b16 %v915
    %v1049 = vunpack.c.h.b16 %v915
    %v1050 = vunpack.c.l.b16 %v916
    %v1051 = vunpack.c.h.b16 %v916
    %v1052 = vunpack.c.l.b16 %v917
    %v1053 = vunpack.c.h.b16 %v917
    %v1054 = vunpack.c.l.b16 %v918
    %v1055 = vunpack.c.h.b16 %v918
    %v1056 = vunpack.c.l.b16 %v919
    %v1057 = vunpack.c.h.b16 %v919
    %v1058 = vunpack.c.l.b16 %v920
    %v1059 = vunpack.c.h.b16 %v920
    %v1060 = vunpack.c.l.b16 %v921
    %v1061 = vunpack.c.h.b16 %v921
    %v1062 = vunpack.c.l.b16 %v922
    %v1063 = vunpack.c.h.b16 %v922
    %v1064 = vunpack.c.l.b16 %v923
    %v1065 = vunpack.c.h.b16 %v923
    %v1066 = vunpack.c.l.b16 %v924
    %v1067 = vunpack.c.h.b16 %v924
    %v1068 = vunpack.c.l.b16 %v925
    %v1069 = vunpack.c.h.b16 %v925
    %v1070 = vunpack.c.l.b16 %v926
    %v1071 = vunpack.c.h.b16 %v926
    %v1072 = vunpack.c.l.b16 %v927
    %v1073 = vunpack.c.h.b16 %v927
    %v1074 = vunpack.c.l.b16 %v928
    %v1075 = vunpack.c.h.b16 %v928
    %v1076 = vunpack.c.l.b16 %v929
    %v1077 = vunpack.c.h.b16 %v929
    %v1078 = vunpack.c.l.b16 %v930
    %v1079 = vunpack.c.h.b16 %v930
    %v1080 = vunpack.c.l.b16 %v931
    %v1081 = vunpack.c.h.b16 %v931
    %v1082 = vunpack.c.l.b16 %v932
    %v1083 = vunpack.c.h.b16 %v932
    %v1084 = vunpack.c.l.b16 %v933
    %v1085 = vunpack.c.h.b16 %v933
    %v1086 = vunpack.c.l.b16 %v934
    %v1087 = vunpack.c.h.b16 %v934
    %v1088 = vunpack.c.l.b16 %v935
    %v1089 = vunpack.c.h.b16 %v935
    %v1090 = vunpack.c.l.b16 %v936
    %v1091 = vunpack.c.h.b16 %v936
    %v1092 = vunpack.c.l.b16 %v937
    %v1093 = vunpack.c.h.b16 %v937
    %v1094 = vunpack.c.l.b16 %v938
    %v1095 = vunpack.c.h.b16 %v938
    %v1096 = vunpack.c.l.b16 %v939
    %v1097 = vunpack.c.h.b16 %v939
    %v1098 = vunpack.c.l.b16 %v940
    %v1099 = vunpack.c.h.b16 %v940
    %v1100 = vunpack.c.l.b16 %v941
    %v1101 = vunpack.c.h.b16 %v941
    %v1102 = vunpack.c.l.b16 %v942
    %v1103 = vunpack.c.h.b16 %v942
    %v1104 = vunpack.c.l.b16 %v943
    %v1105 = vunpack.c.h.b16 %v943
    %v1106 = vunpack.c.l.b16 %v944
    %v1107 = vunpack.c.h.b16 %v944
    %v1108 = vunpack.c.l.b16 %v945
    %v1109 = vunpack.c.h.b16 %v945
    %v1110 = vunpack.c.l.b16 %v946
    %v1111 = vunpack.c.h.b16 %v946
    %v1112 = vunpack.c.l.b16 %v947
    %v1113 = vunpack.c.h.b16 %v947
    %v1114 = vunpack.c.l.b16 %v948
    %v1115 = vunpack.c.h.b16 %v948
    %v1116 = vunpack.c.l.b16 %v949
    %v1117 = vunpack.c.h.b16 %v949
    %v1118 = vunpack.c.l.b16 %v950
    %v1119 = vunpack.c.h.b16 %v950
    %v1120 = vunpack.c.l.b16 %v951
    %v1121 = vunpack.c.h.b16 %v951
    %v1122 = vunpack.c.l.b16 %v952
    %v1123 = vunpack.c.h.b16 %v952
    %v1124 = vunpack.c.l.b16 %v953
    %v1125 = vunpack.c.h.b16 %v953
    %v1126 = vunpack.c.l.b16 %v954
    %v1127 = vunpack.c.h.b16 %v954
    %v1128 = vunpack.c.l.b16 %v955
    %v1129 = vunpack.c.h.b16 %v955
    %v1130 = vunpack.c.l.b16 %v956
    %v1131 = vunpack.c.h.b16 %v956
    %v1132 = vunpack.c.l.b16 %v957
    %v1133 = vunpack.c.h.b16 %v957
    %v1134 = vunpack.c.l.b16 %v958
    %v1135 = vunpack.c.h.b16 %v958
    %v1136 = vunpack.c.l.b16 %v959
    %v1137 = vunpack.c.h.b16 %v959
    %v1138 = vunpack.c.l.b16 %v960
    %v1139 = vunpack.c.h.b16 %v960
    %v1140 = vunpack.c.l.b16 %v961
    %v1141 = vunpack.c.h.b16 %v961
    %v1142 = vunpack.c.l.b16 %v962
    %v1143 = vunpack.c.h.b16 %v962
    %v1144 = vunpack.c.l.b16 %v963
    %v1145 = vunpack.c.h.b16 %v963
    %v1146 = vunpack.c.l.b16 %v964
    %v1147 = vunpack.c.h.b16 %v964
    %v1148 = vunpack.c.l.b16 %v965
    %v1149 = vunpack.c.h.b16 %v965
    %v1150 = vunpack.c.l.b16 %v966
    %v1151 = vunpack.c.h.b16 %v966
    %v1152 = vunpack.c.l.b16 %v967
    %v1153 = vunpack.c.h.b16 %v967
    %v1154 = vunpack.c.l.b16 %v968
    %v1155 = vunpack.c.h.b16 %v968
    %v1156 = vunpack.c.l.b16 %v969
    %v1157 = vunpack.c.h.b16 %v969
    %v1158 = vunpack.c.l.b16 %v970
    %v1159 = vunpack.c.h.b16 %v970
    %v1160 = vunpack.c.l.b16 %v971
    %v1161 = vunpack.c.h.b16 %v971
    %v1162 = vunpack.c.l.b16 %v972
    %v1163 = vunpack.c.h.b16 %v972
    %v1164 = vunpack.c.l.b16 %v973
    %v1165 = vunpack.c.h.b16 %v973
    %v1166 = vpack.c.b16 %v1042, %v1038
    %v1167 = vpack.c.b16 %v1043, %v1039
    %v1168 = vpack.c.b16 %v1044, %v1040
    %v1169 = vpack.c.b16 %v1045, %v1041
    %v1170 = vpack.c.b16 %v1050, %v1046
    %v1171 = vpack.c.b16 %v1051, %v1047
    %v1172 = vpack.c.b16 %v1052, %v1048
    %v1173 = vpack.c.b16 %v1053, %v1049
    %v1174 = vpack.c.b16 %v1058, %v1054
    %v1175 = vpack.c.b16 %v1059, %v1055
    %v1176 = vpack.c.b16 %v1060, %v1056
    %v1177 = vpack.c.b16 %v1061, %v1057
    %v1178 = vpack.c.b16 %v1066, %v1062
    %v1179 = vpack.c.b16 %v1067, %v1063
    %v1180 = vpack.c.b16 %v1068, %v1064
    %v1181 = vpack.c.b16 %v1069, %v1065
    %v1182 = vpack.c.b16 %v1074, %v1070
    %v1183 = vpack.c.b16 %v1075, %v1071
    %v1184 = vpack.c.b16 %v1076, %v1072
    %v1185 = vpack.c.b16 %v1077, %v1073
    %v1186 = vpack.c.b16 %v1082, %v1078
    %v1187 = vpack.c.b16 %v1083, %v1079
    %v1188 = vpack.c.b16 %v1084, %v1080
    %v1189 = vpack.c.b16 %v1085, %v1081
    %v1190 = vpack.c.b16 %v1090, %v1086
    %v1191 = vpack.c.b16 %v1091, %v1087
    %v1192 = vpack.c.b16 %v1092, %v1088
    %v1193 = vpack.c.b16 %v1093, %v1089
    %v1194 = vpack.c.b16 %v1098, %v1094
    %v1195 = vpack.c.b16 %v1099, %v1095
    %v1196 = vpack.c.b16 %v1100, %v1096
    %v1197 = vpack.c.b16 %v1101, %v1097
    %v1198 = vpack.c.b16 %v1106, %v1102
    %v1199 = vpack.c.b16 %v1107, %v1103
    %v1200 = vpack.c.b16 %v1108, %v1104
    %v1201 = vpack.c.b16 %v1109, %v1105
    %v1202 = vpack.c.b16 %v1114, %v1110
    %v1203 = vpack.c.b16 %v1115, %v1111
    %v1204 = vpack.c.b16 %v1116, %v1112
    %v1205 = vpack.c.b16 %v1117, %v1113
    %v1206 = vpack.c.b16 %v1122, %v1118
    %v1207 = vpack.c.b16 %v1123, %v1119
    %v1208 = vpack.c.b16 %v1124, %v1120
    %v1209 = vpack.c.b16 %v1125, %v1121
    %v1210 = vpack.c.b16 %v1130, %v1126
    %v1211 = vpack.c.b16 %v1131, %v1127
    %v1212 = vpack.c.b16 %v1132, %v1128
    %v1213 = vpack.c.b16 %v1133, %v1129
    %v1214 = vpack.c.b16 %v1138, %v1134
    %v1215 = vpack.c.b16 %v1139, %v1135
    %v1216 = vpack.c.b16 %v1140, %v1136
    %v1217 = vpack.c.b16 %v1141, %v1137
    %v1218 = vpack.c.b16 %v1146, %v1142
    %v1219 = vpack.c.b16 %v1147, %v1143
    %v1220 = vpack.c.b16 %v1148, %v1144
    %v1221 = vpack.c.b16 %v1149, %v1145
    %v1222 = vpack.c.b16 %v1154, %v1150
    %v1223 = vpack.c.b16 %v1155, %v1151
    %v1224 = vpack.c.b16 %v1156, %v1152
    %v1225 = vpack.c.b16 %v1157, %v1153
    %v1226 = vpack.c.b16 %v1162, %v1158
    %v1227 = vpack.c.b16 %v1163, %v1159
    %v1228 = vpack.c.b16 %v1164, %v1160
    %v1229 = vpack.c.b16 %v1165, %v1161
    %1294 = vmatpush.bf16.msra.mxu0 %v1194
    %1295 = vmatpush.bf16.msra.mxu0 %v1190
    %1296 = vmatpush.bf16.msra.mxu0 %v1186
    %1297 = vmatpush.bf16.msra.mxu0 %v1182
    %1298 = vmatpush.bf16.msra.mxu0 %v1178
    %1299 = vmatpush.bf16.msra.mxu0 %v1174
    %1300 = vmatpush.bf16.msra.mxu0 %v1170
    %1301 = vmatpush.bf16.msra.mxu0 %v1166
    %1302 = vmatmul.bf16.gmra.mxu0 %v905
    %v1303 = vpop.f32.mrf.mxu0
    %v1304 = vadd.f32 0.0, %v1303
    %v1305 = vpop.f32.mrf.mxu0
    %v1306 = vadd.f32 0.0, %v1305
    %1307 = vmatmul.bf16.gmra.mxu0 %v907
    %v1308 = vpop.f32.mrf.mxu0
    %v1309 = vadd.f32 0.0, %v1308
    %v1310 = vpop.f32.mrf.mxu0
    %v1311 = vadd.f32 0.0, %v1310
    %1312 = vdwg.mxu0
    %1313 = vmatpush.bf16.msra.mxu0 %v1226
    %1314 = vmatpush.bf16.msra.mxu0 %v1222
    %1315 = vmatpush.bf16.msra.mxu0 %v1218
    %1316 = vmatpush.bf16.msra.mxu0 %v1214
    %1317 = vmatpush.bf16.msra.mxu0 %v1210
    %1318 = vmatpush.bf16.msra.mxu0 %v1206
    %1319 = vmatpush.bf16.msra.mxu0 %v1202
    %1320 = vmatpush.bf16.msra.mxu0 %v1198
    %1321 = vmatmul.bf16.gmra.mxu0 %v906
    %v1322 = vpop.f32.mrf.mxu0
    %v1323 = vadd.f32 %v1304, %v1322
    %v1324 = vpop.f32.mrf.mxu0
    %v1325 = vadd.f32 %v1306, %v1324
    %1326 = vmatmul.bf16.gmra.mxu0 %v908
    %v1327 = vpop.f32.mrf.mxu0
    %v1328 = vadd.f32 %v1309, %v1327
    %v1329 = vpop.f32.mrf.mxu0
    %v1330 = vadd.f32 %v1311, %v1329
    %1331 = vdwg.mxu0
    %1332 = vmatpush.bf16.msra.mxu0 %v1195
    %1333 = vmatpush.bf16.msra.mxu0 %v1191
    %1334 = vmatpush.bf16.msra.mxu0 %v1187
    %1335 = vmatpush.bf16.msra.mxu0 %v1183
    %1336 = vmatpush.bf16.msra.mxu0 %v1179
    %1337 = vmatpush.bf16.msra.mxu0 %v1175
    %1338 = vmatpush.bf16.msra.mxu0 %v1171
    %1339 = vmatpush.bf16.msra.mxu0 %v1167
    %1340 = vmatmul.bf16.gmra.mxu0 %v905
    %v1341 = vpop.f32.mrf.mxu0
    %v1342 = vadd.f32 0.0, %v1341
    %v1343 = vpop.f32.mrf.mxu0
    %v1344 = vadd.f32 0.0, %v1343
    %1345 = vmatmul.bf16.gmra.mxu0 %v907
    %v1346 = vpop.f32.mrf.mxu0
    %v1347 = vadd.f32 0.0, %v1346
    %v1348 = vpop.f32.mrf.mxu0
    %v1349 = vadd.f32 0.0, %v1348
    %1350 = vdwg.mxu0
    %1351 = vmatpush.bf16.msra.mxu0 %v1227
    %1352 = vmatpush.bf16.msra.mxu0 %v1223
    %1353 = vmatpush.bf16.msra.mxu0 %v1219
    %1354 = vmatpush.bf16.msra.mxu0 %v1215
    %1355 = vmatpush.bf16.msra.mxu0 %v1211
    %1356 = vmatpush.bf16.msra.mxu0 %v1207
    %1357 = vmatpush.bf16.msra.mxu0 %v1203
    %1358 = vmatpush.bf16.msra.mxu0 %v1199
    %1359 = vmatmul.bf16.gmra.mxu0 %v906
    %v1360 = vpop.f32.mrf.mxu0
    %v1361 = vadd.f32 %v1342, %v1360
    %v1362 = vpop.f32.mrf.mxu0
    %v1363 = vadd.f32 %v1344, %v1362
    %1364 = vmatmul.bf16.gmra.mxu0 %v908
    %v1365 = vpop.f32.mrf.mxu0
    %v1366 = vadd.f32 %v1347, %v1365
    %v1367 = vpop.f32.mrf.mxu0
    %v1368 = vadd.f32 %v1349, %v1367
    %1369 = vdwg.mxu0
    %1370 = vmatpush.bf16.msra.mxu0 %v1196
    %1371 = vmatpush.bf16.msra.mxu0 %v1192
    %1372 = vmatpush.bf16.msra.mxu0 %v1188
    %1373 = vmatpush.bf16.msra.mxu0 %v1184
    %1374 = vmatpush.bf16.msra.mxu0 %v1180
    %1375 = vmatpush.bf16.msra.mxu0 %v1176
    %1376 = vmatpush.bf16.msra.mxu0 %v1172
    %1377 = vmatpush.bf16.msra.mxu0 %v1168
    %1378 = vmatmul.bf16.gmra.mxu0 %v905
    %v1379 = vpop.f32.mrf.mxu0
    %v1380 = vadd.f32 0.0, %v1379
    %v1381 = vpop.f32.mrf.mxu0
    %v1382 = vadd.f32 0.0, %v1381
    %1383 = vmatmul.bf16.gmra.mxu0 %v907
    %v1384 = vpop.f32.mrf.mxu0
    %v1385 = vadd.f32 0.0, %v1384
    %v1386 = vpop.f32.mrf.mxu0
    %v1387 = vadd.f32 0.0, %v1386
    %1388 = vdwg.mxu0
    %1389 = vmatpush.bf16.msra.mxu0 %v1228
    %1390 = vmatpush.bf16.msra.mxu0 %v1224
    %1391 = vmatpush.bf16.msra.mxu0 %v1220
    %1392 = vmatpush.bf16.msra.mxu0 %v1216
    %1393 = vmatpush.bf16.msra.mxu0 %v1212
    %1394 = vmatpush.bf16.msra.mxu0 %v1208
    %1395 = vmatpush.bf16.msra.mxu0 %v1204
    %1396 = vmatpush.bf16.msra.mxu0 %v1200
    %1397 = vmatmul.bf16.gmra.mxu0 %v906
    %v1398 = vpop.f32.mrf.mxu0
    %v1399 = vadd.f32 %v1380, %v1398
    %v1400 = vpop.f32.mrf.mxu0
    %v1401 = vadd.f32 %v1382, %v1400
    %1402 = vmatmul.bf16.gmra.mxu0 %v908
    %v1403 = vpop.f32.mrf.mxu0
    %v1404 = vadd.f32 %v1385, %v1403
    %v1405 = vpop.f32.mrf.mxu0
    %v1406 = vadd.f32 %v1387, %v1405
    %1407 = vdwg.mxu0
    %1408 = vmatpush.bf16.msra.mxu0 %v1197
    %1409 = vmatpush.bf16.msra.mxu0 %v1193
    %1410 = vmatpush.bf16.msra.mxu0 %v1189
    %1411 = vmatpush.bf16.msra.mxu0 %v1185
    %1412 = vmatpush.bf16.msra.mxu0 %v1181
    %1413 = vmatpush.bf16.msra.mxu0 %v1177
    %1414 = vmatpush.bf16.msra.mxu0 %v1173
    %1415 = vmatpush.bf16.msra.mxu0 %v1169
    %1416 = vmatmul.bf16.gmra.mxu0 %v905
    %v1417 = vpop.f32.mrf.mxu0
    %v1418 = vadd.f32 0.0, %v1417
    %v1419 = vpop.f32.mrf.mxu0
    %v1420 = vadd.f32 0.0, %v1419
    %1421 = vmatmul.bf16.gmra.mxu0 %v907
    %v1422 = vpop.f32.mrf.mxu0
    %v1423 = vadd.f32 0.0, %v1422
    %v1424 = vpop.f32.mrf.mxu0
    %v1425 = vadd.f32 0.0, %v1424
    %1426 = vdwg.mxu0
    %1427 = vmatpush.bf16.msra.mxu0 %v1229
    %1428 = vmatpush.bf16.msra.mxu0 %v1225
    %1429 = vmatpush.bf16.msra.mxu0 %v1221
    %1430 = vmatpush.bf16.msra.mxu0 %v1217
    %1431 = vmatpush.bf16.msra.mxu0 %v1213
    %1432 = vmatpush.bf16.msra.mxu0 %v1209
    %1433 = vmatpush.bf16.msra.mxu0 %v1205
    %1434 = vmatpush.bf16.msra.mxu0 %v1201
    %1435 = vmatmul.bf16.gmra.mxu0 %v906
    %v1436 = vpop.f32.mrf.mxu0
    %v1437 = vadd.f32 %v1418, %v1436
    %v1438 = vpop.f32.mrf.mxu0
    %v1439 = vadd.f32 %v1420, %v1438
    %1440 = vmatmul.bf16.gmra.mxu0 %v908
    %v1441 = vpop.f32.mrf.mxu0
    %v1442 = vadd.f32 %v1423, %v1441
    %v1443 = vpop.f32.mrf.mxu0
    %v1444 = vadd.f32 %v1425, %v1443
    %1445 = vdwg.mxu0
    %v1510 = vunpack.c.l.b16 %v841
    %v1511 = vunpack.c.h.b16 %v841
    %v1512 = vunpack.c.l.b16 %v842
    %v1513 = vunpack.c.h.b16 %v842
    %v1514 = vunpack.c.l.b16 %v843
    %v1515 = vunpack.c.h.b16 %v843
    %v1516 = vunpack.c.l.b16 %v844
    %v1517 = vunpack.c.h.b16 %v844
    %v1518 = vunpack.c.l.b16 %v845
    %v1519 = vunpack.c.h.b16 %v845
    %v1520 = vunpack.c.l.b16 %v846
    %v1521 = vunpack.c.h.b16 %v846
    %v1522 = vunpack.c.l.b16 %v847
    %v1523 = vunpack.c.h.b16 %v847
    %v1524 = vunpack.c.l.b16 %v848
    %v1525 = vunpack.c.h.b16 %v848
    %v1526 = vunpack.c.l.b16 %v849
    %v1527 = vunpack.c.h.b16 %v849
    %v1528 = vunpack.c.l.b16 %v850
    %v1529 = vunpack.c.h.b16 %v850
    %v1530 = vunpack.c.l.b16 %v851
    %v1531 = vunpack.c.h.b16 %v851
    %v1532 = vunpack.c.l.b16 %v852
    %v1533 = vunpack.c.h.b16 %v852
    %v1534 = vunpack.c.l.b16 %v853
    %v1535 = vunpack.c.h.b16 %v853
    %v1536 = vunpack.c.l.b16 %v854
    %v1537 = vunpack.c.h.b16 %v854
    %v1538 = vunpack.c.l.b16 %v855
    %v1539 = vunpack.c.h.b16 %v855
    %v1540 = vunpack.c.l.b16 %v856
    %v1541 = vunpack.c.h.b16 %v856
    %v1542 = vunpack.c.l.b16 %v857
    %v1543 = vunpack.c.h.b16 %v857
    %v1544 = vunpack.c.l.b16 %v858
    %v1545 = vunpack.c.h.b16 %v858
    %v1546 = vunpack.c.l.b16 %v859
    %v1547 = vunpack.c.h.b16 %v859
    %v1548 = vunpack.c.l.b16 %v860
    %v1549 = vunpack.c.h.b16 %v860
    %v1550 = vunpack.c.l.b16 %v861
    %v1551 = vunpack.c.h.b16 %v861
    %v1552 = vunpack.c.l.b16 %v862
    %v1553 = vunpack.c.h.b16 %v862
    %v1554 = vunpack.c.l.b16 %v863
    %v1555 = vunpack.c.h.b16 %v863
    %v1556 = vunpack.c.l.b16 %v864
    %v1557 = vunpack.c.h.b16 %v864
    %v1558 = vunpack.c.l.b16 %v865
    %v1559 = vunpack.c.h.b16 %v865
    %v1560 = vunpack.c.l.b16 %v866
    %v1561 = vunpack.c.h.b16 %v866
    %v1562 = vunpack.c.l.b16 %v867
    %v1563 = vunpack.c.h.b16 %v867
    %v1564 = vunpack.c.l.b16 %v868
    %v1565 = vunpack.c.h.b16 %v868
    %v1566 = vunpack.c.l.b16 %v869
    %v1567 = vunpack.c.h.b16 %v869
    %v1568 = vunpack.c.l.b16 %v870
    %v1569 = vunpack.c.h.b16 %v870
    %v1570 = vunpack.c.l.b16 %v871
    %v1571 = vunpack.c.h.b16 %v871
    %v1572 = vunpack.c.l.b16 %v872
    %v1573 = vunpack.c.h.b16 %v872
    %v1574 = vunpack.c.l.b16 %v873
    %v1575 = vunpack.c.h.b16 %v873
    %v1576 = vunpack.c.l.b16 %v874
    %v1577 = vunpack.c.h.b16 %v874
    %v1578 = vunpack.c.l.b16 %v875
    %v1579 = vunpack.c.h.b16 %v875
    %v1580 = vunpack.c.l.b16 %v876
    %v1581 = vunpack.c.h.b16 %v876
    %v1582 = vunpack.c.l.b16 %v877
    %v1583 = vunpack.c.h.b16 %v877
    %v1584 = vunpack.c.l.b16 %v878
    %v1585 = vunpack.c.h.b16 %v878
    %v1586 = vunpack.c.l.b16 %v879
    %v1587 = vunpack.c.h.b16 %v879
    %v1588 = vunpack.c.l.b16 %v880
    %v1589 = vunpack.c.h.b16 %v880
    %v1590 = vunpack.c.l.b16 %v881
    %v1591 = vunpack.c.h.b16 %v881
    %v1592 = vunpack.c.l.b16 %v882
    %v1593 = vunpack.c.h.b16 %v882
    %v1594 = vunpack.c.l.b16 %v883
    %v1595 = vunpack.c.h.b16 %v883
    %v1596 = vunpack.c.l.b16 %v884
    %v1597 = vunpack.c.h.b16 %v884
    %v1598 = vunpack.c.l.b16 %v885
    %v1599 = vunpack.c.h.b16 %v885
    %v1600 = vunpack.c.l.b16 %v886
    %v1601 = vunpack.c.h.b16 %v886
    %v1602 = vunpack.c.l.b16 %v887
    %v1603 = vunpack.c.h.b16 %v887
    %v1604 = vunpack.c.l.b16 %v888
    %v1605 = vunpack.c.h.b16 %v888
    %v1606 = vunpack.c.l.b16 %v889
    %v1607 = vunpack.c.h.b16 %v889
    %v1608 = vunpack.c.l.b16 %v890
    %v1609 = vunpack.c.h.b16 %v890
    %v1610 = vunpack.c.l.b16 %v891
    %v1611 = vunpack.c.h.b16 %v891
    %v1612 = vunpack.c.l.b16 %v892
    %v1613 = vunpack.c.h.b16 %v892
    %v1614 = vunpack.c.l.b16 %v893
    %v1615 = vunpack.c.h.b16 %v893
    %v1616 = vunpack.c.l.b16 %v894
    %v1617 = vunpack.c.h.b16 %v894
    %v1618 = vunpack.c.l.b16 %v895
    %v1619 = vunpack.c.h.b16 %v895
    %v1620 = vunpack.c.l.b16 %v896
    %v1621 = vunpack.c.h.b16 %v896
    %v1622 = vunpack.c.l.b16 %v897
    %v1623 = vunpack.c.h.b16 %v897
    %v1624 = vunpack.c.l.b16 %v898
    %v1625 = vunpack.c.h.b16 %v898
    %v1626 = vunpack.c.l.b16 %v899
    %v1627 = vunpack.c.h.b16 %v899
    %v1628 = vunpack.c.l.b16 %v900
    %v1629 = vunpack.c.h.b16 %v900
    %v1630 = vunpack.c.l.b16 %v901
    %v1631 = vunpack.c.h.b16 %v901
    %v1632 = vunpack.c.l.b16 %v902
    %v1633 = vunpack.c.h.b16 %v902
    %v1634 = vunpack.c.l.b16 %v903
    %v1635 = vunpack.c.h.b16 %v903
    %v1636 = vunpack.c.l.b16 %v904
    %v1637 = vunpack.c.h.b16 %v904
    %v1638 = vpack.c.b16 %v1514, %v1510
    %v1639 = vpack.c.b16 %v1515, %v1511
    %v1640 = vpack.c.b16 %v1516, %v1512
    %v1641 = vpack.c.b16 %v1517, %v1513
    %v1642 = vpack.c.b16 %v1522, %v1518
    %v1643 = vpack.c.b16 %v1523, %v1519
    %v1644 = vpack.c.b16 %v1524, %v1520
    %v1645 = vpack.c.b16 %v1525, %v1521
    %v1646 = vpack.c.b16 %v1530, %v1526
    %v1647 = vpack.c.b16 %v1531, %v1527
    %v1648 = vpack.c.b16 %v1532, %v1528
    %v1649 = vpack.c.b16 %v1533, %v1529
    %v1650 = vpack.c.b16 %v1538, %v1534
    %v1651 = vpack.c.b16 %v1539, %v1535
    %v1652 = vpack.c.b16 %v1540, %v1536
    %v1653 = vpack.c.b16 %v1541, %v1537
    %v1654 = vpack.c.b16 %v1546, %v1542
    %v1655 = vpack.c.b16 %v1547, %v1543
    %v1656 = vpack.c.b16 %v1548, %v1544
    %v1657 = vpack.c.b16 %v1549, %v1545
    %v1658 = vpack.c.b16 %v1554, %v1550
    %v1659 = vpack.c.b16 %v1555, %v1551
    %v1660 = vpack.c.b16 %v1556, %v1552
    %v1661 = vpack.c.b16 %v1557, %v1553
    %v1662 = vpack.c.b16 %v1562, %v1558
    %v1663 = vpack.c.b16 %v1563, %v1559
    %v1664 = vpack.c.b16 %v1564, %v1560
    %v1665 = vpack.c.b16 %v1565, %v1561
    %v1666 = vpack.c.b16 %v1570, %v1566
    %v1667 = vpack.c.b16 %v1571, %v1567
    %v1668 = vpack.c.b16 %v1572, %v1568
    %v1669 = vpack.c.b16 %v1573, %v1569
    %v1670 = vpack.c.b16 %v1578, %v1574
    %v1671 = vpack.c.b16 %v1579, %v1575
    %v1672 = vpack.c.b16 %v1580, %v1576
    %v1673 = vpack.c.b16 %v1581, %v1577
    %v1674 = vpack.c.b16 %v1586, %v1582
    %v1675 = vpack.c.b16 %v1587, %v1583
    %v1676 = vpack.c.b16 %v1588, %v1584
    %v1677 = vpack.c.b16 %v1589, %v1585
    %v1678 = vpack.c.b16 %v1594, %v1590
    %v1679 = vpack.c.b16 %v1595, %v1591
    %v1680 = vpack.c.b16 %v1596, %v1592
    %v1681 = vpack.c.b16 %v1597, %v1593
    %v1682 = vpack.c.b16 %v1602, %v1598
    %v1683 = vpack.c.b16 %v1603, %v1599
    %v1684 = vpack.c.b16 %v1604, %v1600
    %v1685 = vpack.c.b16 %v1605, %v1601
    %v1686 = vpack.c.b16 %v1610, %v1606
    %v1687 = vpack.c.b16 %v1611, %v1607
    %v1688 = vpack.c.b16 %v1612, %v1608
    %v1689 = vpack.c.b16 %v1613, %v1609
    %v1690 = vpack.c.b16 %v1618, %v1614
    %v1691 = vpack.c.b16 %v1619, %v1615
    %v1692 = vpack.c.b16 %v1620, %v1616
    %v1693 = vpack.c.b16 %v1621, %v1617
    %v1694 = vpack.c.b16 %v1626, %v1622
    %v1695 = vpack.c.b16 %v1627, %v1623
    %v1696 = vpack.c.b16 %v1628, %v1624
    %v1697 = vpack.c.b16 %v1629, %v1625
    %v1698 = vpack.c.b16 %v1634, %v1630
    %v1699 = vpack.c.b16 %v1635, %v1631
    %v1700 = vpack.c.b16 %v1636, %v1632
    %v1701 = vpack.c.b16 %v1637, %v1633
    %1766 = vmatpush.bf16.msra.mxu0 %v1666
    %1767 = vmatpush.bf16.msra.mxu0 %v1662
    %1768 = vmatpush.bf16.msra.mxu0 %v1658
    %1769 = vmatpush.bf16.msra.mxu0 %v1654
    %1770 = vmatpush.bf16.msra.mxu0 %v1650
    %1771 = vmatpush.bf16.msra.mxu0 %v1646
    %1772 = vmatpush.bf16.msra.mxu0 %v1642
    %1773 = vmatpush.bf16.msra.mxu0 %v1638
    %1774 = vmatmul.bf16.gmra.mxu0 %v837
    %v1775 = vpop.f32.mrf.mxu0
    %v1776 = vadd.f32 %v1323, %v1775
    %v1777 = vpop.f32.mrf.mxu0
    %v1778 = vadd.f32 %v1325, %v1777
    %1779 = vmatmul.bf16.gmra.mxu0 %v839
    %v1780 = vpop.f32.mrf.mxu0
    %v1781 = vadd.f32 %v1328, %v1780
    %v1782 = vpop.f32.mrf.mxu0
    %v1783 = vadd.f32 %v1330, %v1782
    %1784 = vdwg.mxu0
    %1785 = vmatpush.bf16.msra.mxu0 %v1698
    %1786 = vmatpush.bf16.msra.mxu0 %v1694
    %1787 = vmatpush.bf16.msra.mxu0 %v1690
    %1788 = vmatpush.bf16.msra.mxu0 %v1686
    %1789 = vmatpush.bf16.msra.mxu0 %v1682
    %1790 = vmatpush.bf16.msra.mxu0 %v1678
    %1791 = vmatpush.bf16.msra.mxu0 %v1674
    %1792 = vmatpush.bf16.msra.mxu0 %v1670
    %1793 = vmatmul.bf16.gmra.mxu0 %v838
    %v1794 = vpop.f32.mrf.mxu0
    %v1795 = vadd.f32 %v1776, %v1794
    %v1796 = vpop.f32.mrf.mxu0
    %v1797 = vadd.f32 %v1778, %v1796
    %1798 = vmatmul.bf16.gmra.mxu0 %v840
    %v1799 = vpop.f32.mrf.mxu0
    %v1800 = vadd.f32 %v1781, %v1799
    %v1801 = vpop.f32.mrf.mxu0
    %v1802 = vadd.f32 %v1783, %v1801
    %1803 = vdwg.mxu0
    %1804 = vmatpush.bf16.msra.mxu0 %v1667
    %1805 = vmatpush.bf16.msra.mxu0 %v1663
    %1806 = vmatpush.bf16.msra.mxu0 %v1659
    %1807 = vmatpush.bf16.msra.mxu0 %v1655
    %1808 = vmatpush.bf16.msra.mxu0 %v1651
    %1809 = vmatpush.bf16.msra.mxu0 %v1647
    %1810 = vmatpush.bf16.msra.mxu0 %v1643
    %1811 = vmatpush.bf16.msra.mxu0 %v1639
    %1812 = vmatmul.bf16.gmra.mxu0 %v837
    %v1813 = vpop.f32.mrf.mxu0
    %v1814 = vadd.f32 %v1361, %v1813
    %v1815 = vpop.f32.mrf.mxu0
    %v1816 = vadd.f32 %v1363, %v1815
    %1817 = vmatmul.bf16.gmra.mxu0 %v839
    %v1818 = vpop.f32.mrf.mxu0
    %v1819 = vadd.f32 %v1366, %v1818
    %v1820 = vpop.f32.mrf.mxu0
    %v1821 = vadd.f32 %v1368, %v1820
    %1822 = vdwg.mxu0
    %1823 = vmatpush.bf16.msra.mxu0 %v1699
    %1824 = vmatpush.bf16.msra.mxu0 %v1695
    %1825 = vmatpush.bf16.msra.mxu0 %v1691
    %1826 = vmatpush.bf16.msra.mxu0 %v1687
    %1827 = vmatpush.bf16.msra.mxu0 %v1683
    %1828 = vmatpush.bf16.msra.mxu0 %v1679
    %1829 = vmatpush.bf16.msra.mxu0 %v1675
    %1830 = vmatpush.bf16.msra.mxu0 %v1671
    %1831 = vmatmul.bf16.gmra.mxu0 %v838
    %v1832 = vpop.f32.mrf.mxu0
    %v1833 = vadd.f32 %v1814, %v1832
    %v1834 = vpop.f32.mrf.mxu0
    %v1835 = vadd.f32 %v1816, %v1834
    %1836 = vmatmul.bf16.gmra.mxu0 %v840
    %v1837 = vpop.f32.mrf.mxu0
    %v1838 = vadd.f32 %v1819, %v1837
    %v1839 = vpop.f32.mrf.mxu0
    %v1840 = vadd.f32 %v1821, %v1839
    %1841 = vdwg.mxu0
    %1842 = vmatpush.bf16.msra.mxu0 %v1668
    %1843 = vmatpush.bf16.msra.mxu0 %v1664
    %1844 = vmatpush.bf16.msra.mxu0 %v1660
    %1845 = vmatpush.bf16.msra.mxu0 %v1656
    %1846 = vmatpush.bf16.msra.mxu0 %v1652
    %1847 = vmatpush.bf16.msra.mxu0 %v1648
    %1848 = vmatpush.bf16.msra.mxu0 %v1644
    %1849 = vmatpush.bf16.msra.mxu0 %v1640
    %1850 = vmatmul.bf16.gmra.mxu0 %v837
    %v1851 = vpop.f32.mrf.mxu0
    %v1852 = vadd.f32 %v1399, %v1851
    %v1853 = vpop.f32.mrf.mxu0
    %v1854 = vadd.f32 %v1401, %v1853
    %1855 = vmatmul.bf16.gmra.mxu0 %v839
    %v1856 = vpop.f32.mrf.mxu0
    %v1857 = vadd.f32 %v1404, %v1856
    %v1858 = vpop.f32.mrf.mxu0
    %v1859 = vadd.f32 %v1406, %v1858
    %1860 = vdwg.mxu0
    %1861 = vmatpush.bf16.msra.mxu0 %v1700
    %1862 = vmatpush.bf16.msra.mxu0 %v1696
    %1863 = vmatpush.bf16.msra.mxu0 %v1692
    %1864 = vmatpush.bf16.msra.mxu0 %v1688
    %1865 = vmatpush.bf16.msra.mxu0 %v1684
    %1866 = vmatpush.bf16.msra.mxu0 %v1680
    %1867 = vmatpush.bf16.msra.mxu0 %v1676
    %1868 = vmatpush.bf16.msra.mxu0 %v1672
    %1869 = vmatmul.bf16.gmra.mxu0 %v838
    %v1870 = vpop.f32.mrf.mxu0
    %v1871 = vadd.f32 %v1852, %v1870
    %v1872 = vpop.f32.mrf.mxu0
    %v1873 = vadd.f32 %v1854, %v1872
    %1874 = vmatmul.bf16.gmra.mxu0 %v840
    %v1875 = vpop.f32.mrf.mxu0
    %v1876 = vadd.f32 %v1857, %v1875
    %v1877 = vpop.f32.mrf.mxu0
    %v1878 = vadd.f32 %v1859, %v1877
    %1879 = vdwg.mxu0
    %1880 = vmatpush.bf16.msra.mxu0 %v1669
    %1881 = vmatpush.bf16.msra.mxu0 %v1665
    %1882 = vmatpush.bf16.msra.mxu0 %v1661
    %1883 = vmatpush.bf16.msra.mxu0 %v1657
    %1884 = vmatpush.bf16.msra.mxu0 %v1653
    %1885 = vmatpush.bf16.msra.mxu0 %v1649
    %1886 = vmatpush.bf16.msra.mxu0 %v1645
    %1887 = vmatpush.bf16.msra.mxu0 %v1641
    %1888 = vmatmul.bf16.gmra.mxu0 %v837
    %v1889 = vpop.f32.mrf.mxu0
    %v1890 = vadd.f32 %v1437, %v1889
    %v1891 = vpop.f32.mrf.mxu0
    %v1892 = vadd.f32 %v1439, %v1891
    %1893 = vmatmul.bf16.gmra.mxu0 %v839
    %v1894 = vpop.f32.mrf.mxu0
    %v1895 = vadd.f32 %v1442, %v1894
    %v1896 = vpop.f32.mrf.mxu0
    %v1897 = vadd.f32 %v1444, %v1896
    %1898 = vdwg.mxu0
    %1899 = vmatpush.bf16.msra.mxu0 %v1701
    %1900 = vmatpush.bf16.msra.mxu0 %v1697
    %1901 = vmatpush.bf16.msra.mxu0 %v1693
    %1902 = vmatpush.bf16.msra.mxu0 %v1689
    %1903 = vmatpush.bf16.msra.mxu0 %v1685
    %1904 = vmatpush.bf16.msra.mxu0 %v1681
    %1905 = vmatpush.bf16.msra.mxu0 %v1677
    %1906 = vmatpush.bf16.msra.mxu0 %v1673
    %1907 = vmatmul.bf16.gmra.mxu0 %v838
    %v1908 = vpop.f32.mrf.mxu0
    %v1909 = vadd.f32 %v1890, %v1908
    %v1910 = vpop.f32.mrf.mxu0
    %v1911 = vadd.f32 %v1892, %v1910
    %1912 = vmatmul.bf16.gmra.mxu0 %v840
    %v1913 = vpop.f32.mrf.mxu0
    %v1914 = vadd.f32 %v1895, %v1913
    %v1915 = vpop.f32.mrf.mxu0
    %v1916 = vadd.f32 %v1897, %v1915
    %1917 = vdwg.mxu0
    %v1918 = vpack.c.bf16 %v831, %v829
    %v1919 = vpack.c.bf16 %v832, %v830
    %v1920 = vpack.c.bf16 %v835, %v833
    %v1921 = vpack.c.bf16 %v836, %v834
    %s1922 = scalar_lea.vmem %s6, 1024
    %v1923 = vld [vmem:[%s1922] sm:$0xff]
    %v1924 = vld [vmem:[%s1922 + $0x8] sm:$0xff]
    %v1925 = vld [vmem:[%s1922 + $0x10] sm:$0xff]
    %v1926 = vld [vmem:[%s1922 + $0x18] sm:$0xff]
    %v1927 = vld [vmem:[%s1922 + $0x20] sm:$0xff]
    %v1928 = vld [vmem:[%s1922 + $0x28] sm:$0xff]
    %v1929 = vld [vmem:[%s1922 + $0x30] sm:$0xff]
    %v1930 = vld [vmem:[%s1922 + $0x38] sm:$0xff]
    %v1931 = vld [vmem:[%s1922 + $0x40] sm:$0xff]
    %v1932 = vld [vmem:[%s1922 + $0x48] sm:$0xff]
    %v1933 = vld [vmem:[%s1922 + $0x50] sm:$0xff]
    %v1934 = vld [vmem:[%s1922 + $0x58] sm:$0xff]
    %v1935 = vld [vmem:[%s1922 + $0x60] sm:$0xff]
    %v1936 = vld [vmem:[%s1922 + $0x68] sm:$0xff]
    %v1937 = vld [vmem:[%s1922 + $0x70] sm:$0xff]
    %v1938 = vld [vmem:[%s1922 + $0x78] sm:$0xff]
    %v1939 = vld [vmem:[%s1922 + $0x80] sm:$0xff]
    %v1940 = vld [vmem:[%s1922 + $0x88] sm:$0xff]
    %v1941 = vld [vmem:[%s1922 + $0x90] sm:$0xff]
    %v1942 = vld [vmem:[%s1922 + $0x98] sm:$0xff]
    %v1943 = vld [vmem:[%s1922 + $0xa0] sm:$0xff]
    %v1944 = vld [vmem:[%s1922 + $0xa8] sm:$0xff]
    %v1945 = vld [vmem:[%s1922 + $0xb0] sm:$0xff]
    %v1946 = vld [vmem:[%s1922 + $0xb8] sm:$0xff]
    %v1947 = vld [vmem:[%s1922 + $0xc0] sm:$0xff]
    %v1948 = vld [vmem:[%s1922 + $0xc8] sm:$0xff]
    %v1949 = vld [vmem:[%s1922 + $0xd0] sm:$0xff]
    %v1950 = vld [vmem:[%s1922 + $0xd8] sm:$0xff]
    %v1951 = vld [vmem:[%s1922 + $0xe0] sm:$0xff]
    %v1952 = vld [vmem:[%s1922 + $0xe8] sm:$0xff]
    %v1953 = vld [vmem:[%s1922 + $0xf0] sm:$0xff]
    %v1954 = vld [vmem:[%s1922 + $0xf8] sm:$0xff]
    %v1955 = vld [vmem:[%s1922 + $0x100] sm:$0xff]
    %v1956 = vld [vmem:[%s1922 + $0x108] sm:$0xff]
    %v1957 = vld [vmem:[%s1922 + $0x110] sm:$0xff]
    %v1958 = vld [vmem:[%s1922 + $0x118] sm:$0xff]
    %v1959 = vld [vmem:[%s1922 + $0x120] sm:$0xff]
    %v1960 = vld [vmem:[%s1922 + $0x128] sm:$0xff]
    %v1961 = vld [vmem:[%s1922 + $0x130] sm:$0xff]
    %v1962 = vld [vmem:[%s1922 + $0x138] sm:$0xff]
    %v1963 = vld [vmem:[%s1922 + $0x140] sm:$0xff]
    %v1964 = vld [vmem:[%s1922 + $0x148] sm:$0xff]
    %v1965 = vld [vmem:[%s1922 + $0x150] sm:$0xff]
    %v1966 = vld [vmem:[%s1922 + $0x158] sm:$0xff]
    %v1967 = vld [vmem:[%s1922 + $0x160] sm:$0xff]
    %v1968 = vld [vmem:[%s1922 + $0x168] sm:$0xff]
    %v1969 = vld [vmem:[%s1922 + $0x170] sm:$0xff]
    %v1970 = vld [vmem:[%s1922 + $0x178] sm:$0xff]
    %v1971 = vld [vmem:[%s1922 + $0x180] sm:$0xff]
    %v1972 = vld [vmem:[%s1922 + $0x188] sm:$0xff]
    %v1973 = vld [vmem:[%s1922 + $0x190] sm:$0xff]
    %v1974 = vld [vmem:[%s1922 + $0x198] sm:$0xff]
    %v1975 = vld [vmem:[%s1922 + $0x1a0] sm:$0xff]
    %v1976 = vld [vmem:[%s1922 + $0x1a8] sm:$0xff]
    %v1977 = vld [vmem:[%s1922 + $0x1b0] sm:$0xff]
    %v1978 = vld [vmem:[%s1922 + $0x1b8] sm:$0xff]
    %v1979 = vld [vmem:[%s1922 + $0x1c0] sm:$0xff]
    %v1980 = vld [vmem:[%s1922 + $0x1c8] sm:$0xff]
    %v1981 = vld [vmem:[%s1922 + $0x1d0] sm:$0xff]
    %v1982 = vld [vmem:[%s1922 + $0x1d8] sm:$0xff]
    %v1983 = vld [vmem:[%s1922 + $0x1e0] sm:$0xff]
    %v1984 = vld [vmem:[%s1922 + $0x1e8] sm:$0xff]
    %v1985 = vld [vmem:[%s1922 + $0x1f0] sm:$0xff]
    %v1986 = vld [vmem:[%s1922 + $0x1f8] sm:$0xff]
    %v2051 = vunpack.c.l.b16 %v1923
    %v2052 = vunpack.c.h.b16 %v1923
    %v2053 = vunpack.c.l.b16 %v1924
    %v2054 = vunpack.c.h.b16 %v1924
    %v2055 = vunpack.c.l.b16 %v1925
    %v2056 = vunpack.c.h.b16 %v1925
    %v2057 = vunpack.c.l.b16 %v1926
    %v2058 = vunpack.c.h.b16 %v1926
    %v2059 = vunpack.c.l.b16 %v1927
    %v2060 = vunpack.c.h.b16 %v1927
    %v2061 = vunpack.c.l.b16 %v1928
    %v2062 = vunpack.c.h.b16 %v1928
    %v2063 = vunpack.c.l.b16 %v1929
    %v2064 = vunpack.c.h.b16 %v1929
    %v2065 = vunpack.c.l.b16 %v1930
    %v2066 = vunpack.c.h.b16 %v1930
    %v2067 = vunpack.c.l.b16 %v1931
    %v2068 = vunpack.c.h.b16 %v1931
    %v2069 = vunpack.c.l.b16 %v1932
    %v2070 = vunpack.c.h.b16 %v1932
    %v2071 = vunpack.c.l.b16 %v1933
    %v2072 = vunpack.c.h.b16 %v1933
    %v2073 = vunpack.c.l.b16 %v1934
    %v2074 = vunpack.c.h.b16 %v1934
    %v2075 = vunpack.c.l.b16 %v1935
    %v2076 = vunpack.c.h.b16 %v1935
    %v2077 = vunpack.c.l.b16 %v1936
    %v2078 = vunpack.c.h.b16 %v1936
    %v2079 = vunpack.c.l.b16 %v1937
    %v2080 = vunpack.c.h.b16 %v1937
    %v2081 = vunpack.c.l.b16 %v1938
    %v2082 = vunpack.c.h.b16 %v1938
    %v2083 = vunpack.c.l.b16 %v1939
    %v2084 = vunpack.c.h.b16 %v1939
    %v2085 = vunpack.c.l.b16 %v1940
    %v2086 = vunpack.c.h.b16 %v1940
    %v2087 = vunpack.c.l.b16 %v1941
    %v2088 = vunpack.c.h.b16 %v1941
    %v2089 = vunpack.c.l.b16 %v1942
    %v2090 = vunpack.c.h.b16 %v1942
    %v2091 = vunpack.c.l.b16 %v1943
    %v2092 = vunpack.c.h.b16 %v1943
    %v2093 = vunpack.c.l.b16 %v1944
    %v2094 = vunpack.c.h.b16 %v1944
    %v2095 = vunpack.c.l.b16 %v1945
    %v2096 = vunpack.c.h.b16 %v1945
    %v2097 = vunpack.c.l.b16 %v1946
    %v2098 = vunpack.c.h.b16 %v1946
    %v2099 = vunpack.c.l.b16 %v1947
    %v2100 = vunpack.c.h.b16 %v1947
    %v2101 = vunpack.c.l.b16 %v1948
    %v2102 = vunpack.c.h.b16 %v1948
    %v2103 = vunpack.c.l.b16 %v1949
    %v2104 = vunpack.c.h.b16 %v1949
    %v2105 = vunpack.c.l.b16 %v1950
    %v2106 = vunpack.c.h.b16 %v1950
    %v2107 = vunpack.c.l.b16 %v1951
    %v2108 = vunpack.c.h.b16 %v1951
    %v2109 = vunpack.c.l.b16 %v1952
    %v2110 = vunpack.c.h.b16 %v1952
    %v2111 = vunpack.c.l.b16 %v1953
    %v2112 = vunpack.c.h.b16 %v1953
    %v2113 = vunpack.c.l.b16 %v1954
    %v2114 = vunpack.c.h.b16 %v1954
    %v2115 = vunpack.c.l.b16 %v1955
    %v2116 = vunpack.c.h.b16 %v1955
    %v2117 = vunpack.c.l.b16 %v1956
    %v2118 = vunpack.c.h.b16 %v1956
    %v2119 = vunpack.c.l.b16 %v1957
    %v2120 = vunpack.c.h.b16 %v1957
    %v2121 = vunpack.c.l.b16 %v1958
    %v2122 = vunpack.c.h.b16 %v1958
    %v2123 = vunpack.c.l.b16 %v1959
    %v2124 = vunpack.c.h.b16 %v1959
    %v2125 = vunpack.c.l.b16 %v1960
    %v2126 = vunpack.c.h.b16 %v1960
    %v2127 = vunpack.c.l.b16 %v1961
    %v2128 = vunpack.c.h.b16 %v1961
    %v2129 = vunpack.c.l.b16 %v1962
    %v2130 = vunpack.c.h.b16 %v1962
    %v2131 = vunpack.c.l.b16 %v1963
    %v2132 = vunpack.c.h.b16 %v1963
    %v2133 = vunpack.c.l.b16 %v1964
    %v2134 = vunpack.c.h.b16 %v1964
    %v2135 = vunpack.c.l.b16 %v1965
    %v2136 = vunpack.c.h.b16 %v1965
    %v2137 = vunpack.c.l.b16 %v1966
    %v2138 = vunpack.c.h.b16 %v1966
    %v2139 = vunpack.c.l.b16 %v1967
    %v2140 = vunpack.c.h.b16 %v1967
    %v2141 = vunpack.c.l.b16 %v1968
    %v2142 = vunpack.c.h.b16 %v1968
    %v2143 = vunpack.c.l.b16 %v1969
    %v2144 = vunpack.c.h.b16 %v1969
    %v2145 = vunpack.c.l.b16 %v1970
    %v2146 = vunpack.c.h.b16 %v1970
    %v2147 = vunpack.c.l.b16 %v1971
    %v2148 = vunpack.c.h.b16 %v1971
    %v2149 = vunpack.c.l.b16 %v1972
    %v2150 = vunpack.c.h.b16 %v1972
    %v2151 = vunpack.c.l.b16 %v1973
    %v2152 = vunpack.c.h.b16 %v1973
    %v2153 = vunpack.c.l.b16 %v1974
    %v2154 = vunpack.c.h.b16 %v1974
    %v2155 = vunpack.c.l.b16 %v1975
    %v2156 = vunpack.c.h.b16 %v1975
    %v2157 = vunpack.c.l.b16 %v1976
    %v2158 = vunpack.c.h.b16 %v1976
    %v2159 = vunpack.c.l.b16 %v1977
    %v2160 = vunpack.c.h.b16 %v1977
    %v2161 = vunpack.c.l.b16 %v1978
    %v2162 = vunpack.c.h.b16 %v1978
    %v2163 = vunpack.c.l.b16 %v1979
    %v2164 = vunpack.c.h.b16 %v1979
    %v2165 = vunpack.c.l.b16 %v1980
    %v2166 = vunpack.c.h.b16 %v1980
    %v2167 = vunpack.c.l.b16 %v1981
    %v2168 = vunpack.c.h.b16 %v1981
    %v2169 = vunpack.c.l.b16 %v1982
    %v2170 = vunpack.c.h.b16 %v1982
    %v2171 = vunpack.c.l.b16 %v1983
    %v2172 = vunpack.c.h.b16 %v1983
    %v2173 = vunpack.c.l.b16 %v1984
    %v2174 = vunpack.c.h.b16 %v1984
    %v2175 = vunpack.c.l.b16 %v1985
    %v2176 = vunpack.c.h.b16 %v1985
    %v2177 = vunpack.c.l.b16 %v1986
    %v2178 = vunpack.c.h.b16 %v1986
    %v2179 = vpack.c.b16 %v2055, %v2051
    %v2180 = vpack.c.b16 %v2056, %v2052
    %v2181 = vpack.c.b16 %v2057, %v2053
    %v2182 = vpack.c.b16 %v2058, %v2054
    %v2183 = vpack.c.b16 %v2063, %v2059
    %v2184 = vpack.c.b16 %v2064, %v2060
    %v2185 = vpack.c.b16 %v2065, %v2061
    %v2186 = vpack.c.b16 %v2066, %v2062
    %v2187 = vpack.c.b16 %v2071, %v2067
    %v2188 = vpack.c.b16 %v2072, %v2068
    %v2189 = vpack.c.b16 %v2073, %v2069
    %v2190 = vpack.c.b16 %v2074, %v2070
    %v2191 = vpack.c.b16 %v2079, %v2075
    %v2192 = vpack.c.b16 %v2080, %v2076
    %v2193 = vpack.c.b16 %v2081, %v2077
    %v2194 = vpack.c.b16 %v2082, %v2078
    %v2195 = vpack.c.b16 %v2087, %v2083
    %v2196 = vpack.c.b16 %v2088, %v2084
    %v2197 = vpack.c.b16 %v2089, %v2085
    %v2198 = vpack.c.b16 %v2090, %v2086
    %v2199 = vpack.c.b16 %v2095, %v2091
    %v2200 = vpack.c.b16 %v2096, %v2092
    %v2201 = vpack.c.b16 %v2097, %v2093
    %v2202 = vpack.c.b16 %v2098, %v2094
    %v2203 = vpack.c.b16 %v2103, %v2099
    %v2204 = vpack.c.b16 %v2104, %v2100
    %v2205 = vpack.c.b16 %v2105, %v2101
    %v2206 = vpack.c.b16 %v2106, %v2102
    %v2207 = vpack.c.b16 %v2111, %v2107
    %v2208 = vpack.c.b16 %v2112, %v2108
    %v2209 = vpack.c.b16 %v2113, %v2109
    %v2210 = vpack.c.b16 %v2114, %v2110
    %v2211 = vpack.c.b16 %v2119, %v2115
    %v2212 = vpack.c.b16 %v2120, %v2116
    %v2213 = vpack.c.b16 %v2121, %v2117
    %v2214 = vpack.c.b16 %v2122, %v2118
    %v2215 = vpack.c.b16 %v2127, %v2123
    %v2216 = vpack.c.b16 %v2128, %v2124
    %v2217 = vpack.c.b16 %v2129, %v2125
    %v2218 = vpack.c.b16 %v2130, %v2126
    %v2219 = vpack.c.b16 %v2135, %v2131
    %v2220 = vpack.c.b16 %v2136, %v2132
    %v2221 = vpack.c.b16 %v2137, %v2133
    %v2222 = vpack.c.b16 %v2138, %v2134
    %v2223 = vpack.c.b16 %v2143, %v2139
    %v2224 = vpack.c.b16 %v2144, %v2140
    %v2225 = vpack.c.b16 %v2145, %v2141
    %v2226 = vpack.c.b16 %v2146, %v2142
    %v2227 = vpack.c.b16 %v2151, %v2147
    %v2228 = vpack.c.b16 %v2152, %v2148
    %v2229 = vpack.c.b16 %v2153, %v2149
    %v2230 = vpack.c.b16 %v2154, %v2150
    %v2231 = vpack.c.b16 %v2159, %v2155
    %v2232 = vpack.c.b16 %v2160, %v2156
    %v2233 = vpack.c.b16 %v2161, %v2157
    %v2234 = vpack.c.b16 %v2162, %v2158
    %v2235 = vpack.c.b16 %v2167, %v2163
    %v2236 = vpack.c.b16 %v2168, %v2164
    %v2237 = vpack.c.b16 %v2169, %v2165
    %v2238 = vpack.c.b16 %v2170, %v2166
    %v2239 = vpack.c.b16 %v2175, %v2171
    %v2240 = vpack.c.b16 %v2176, %v2172
    %v2241 = vpack.c.b16 %v2177, %v2173
    %v2242 = vpack.c.b16 %v2178, %v2174
    %2307 = vmatpush.bf16.msra.mxu0 %v2207
    %2308 = vmatpush.bf16.msra.mxu0 %v2203
    %2309 = vmatpush.bf16.msra.mxu0 %v2199
    %2310 = vmatpush.bf16.msra.mxu0 %v2195
    %2311 = vmatpush.bf16.msra.mxu0 %v2191
    %2312 = vmatpush.bf16.msra.mxu0 %v2187
    %2313 = vmatpush.bf16.msra.mxu0 %v2183
    %2314 = vmatpush.bf16.msra.mxu0 %v2179
    %2315 = vmatmul.bf16.gmra.mxu0 %v1918
    %v2316 = vpop.f32.mrf.mxu0
    %v2317 = vadd.f32 0.0, %v2316
    %v2318 = vpop.f32.mrf.mxu0
    %v2319 = vadd.f32 0.0, %v2318
    %2320 = vmatmul.bf16.gmra.mxu0 %v1920
    %v2321 = vpop.f32.mrf.mxu0
    %v2322 = vadd.f32 0.0, %v2321
    %v2323 = vpop.f32.mrf.mxu0
    %v2324 = vadd.f32 0.0, %v2323
    %2325 = vdwg.mxu0
    %2326 = vmatpush.bf16.msra.mxu0 %v2239
    %2327 = vmatpush.bf16.msra.mxu0 %v2235
    %2328 = vmatpush.bf16.msra.mxu0 %v2231
    %2329 = vmatpush.bf16.msra.mxu0 %v2227
    %2330 = vmatpush.bf16.msra.mxu0 %v2223
    %2331 = vmatpush.bf16.msra.mxu0 %v2219
    %2332 = vmatpush.bf16.msra.mxu0 %v2215
    %2333 = vmatpush.bf16.msra.mxu0 %v2211
    %2334 = vmatmul.bf16.gmra.mxu0 %v1919
    %v2335 = vpop.f32.mrf.mxu0
    %v2336 = vadd.f32 %v2317, %v2335
    %v2337 = vpop.f32.mrf.mxu0
    %v2338 = vadd.f32 %v2319, %v2337
    %2339 = vmatmul.bf16.gmra.mxu0 %v1921
    %v2340 = vpop.f32.mrf.mxu0
    %v2341 = vadd.f32 %v2322, %v2340
    %v2342 = vpop.f32.mrf.mxu0
    %v2343 = vadd.f32 %v2324, %v2342
    %2344 = vdwg.mxu0
    %2345 = vmatpush.bf16.msra.mxu0 %v2208
    %2346 = vmatpush.bf16.msra.mxu0 %v2204
    %2347 = vmatpush.bf16.msra.mxu0 %v2200
    %2348 = vmatpush.bf16.msra.mxu0 %v2196
    %2349 = vmatpush.bf16.msra.mxu0 %v2192
    %2350 = vmatpush.bf16.msra.mxu0 %v2188
    %2351 = vmatpush.bf16.msra.mxu0 %v2184
    %2352 = vmatpush.bf16.msra.mxu0 %v2180
    %2353 = vmatmul.bf16.gmra.mxu0 %v1918
    %v2354 = vpop.f32.mrf.mxu0
    %v2355 = vadd.f32 0.0, %v2354
    %v2356 = vpop.f32.mrf.mxu0
    %v2357 = vadd.f32 0.0, %v2356
    %2358 = vmatmul.bf16.gmra.mxu0 %v1920
    %v2359 = vpop.f32.mrf.mxu0
    %v2360 = vadd.f32 0.0, %v2359
    %v2361 = vpop.f32.mrf.mxu0
    %v2362 = vadd.f32 0.0, %v2361
    %2363 = vdwg.mxu0
    %2364 = vmatpush.bf16.msra.mxu0 %v2240
    %2365 = vmatpush.bf16.msra.mxu0 %v2236
    %2366 = vmatpush.bf16.msra.mxu0 %v2232
    %2367 = vmatpush.bf16.msra.mxu0 %v2228
    %2368 = vmatpush.bf16.msra.mxu0 %v2224
    %2369 = vmatpush.bf16.msra.mxu0 %v2220
    %2370 = vmatpush.bf16.msra.mxu0 %v2216
    %2371 = vmatpush.bf16.msra.mxu0 %v2212
    %2372 = vmatmul.bf16.gmra.mxu0 %v1919
    %v2373 = vpop.f32.mrf.mxu0
    %v2374 = vadd.f32 %v2355, %v2373
    %v2375 = vpop.f32.mrf.mxu0
    %v2376 = vadd.f32 %v2357, %v2375
    %2377 = vmatmul.bf16.gmra.mxu0 %v1921
    %v2378 = vpop.f32.mrf.mxu0
    %v2379 = vadd.f32 %v2360, %v2378
    %v2380 = vpop.f32.mrf.mxu0
    %v2381 = vadd.f32 %v2362, %v2380
    %2382 = vdwg.mxu0
    %2383 = vmatpush.bf16.msra.mxu0 %v2209
    %2384 = vmatpush.bf16.msra.mxu0 %v2205
    %2385 = vmatpush.bf16.msra.mxu0 %v2201
    %2386 = vmatpush.bf16.msra.mxu0 %v2197
    %2387 = vmatpush.bf16.msra.mxu0 %v2193
    %2388 = vmatpush.bf16.msra.mxu0 %v2189
    %2389 = vmatpush.bf16.msra.mxu0 %v2185
    %2390 = vmatpush.bf16.msra.mxu0 %v2181
    %2391 = vmatmul.bf16.gmra.mxu0 %v1918
    %v2392 = vpop.f32.mrf.mxu0
    %v2393 = vadd.f32 0.0, %v2392
    %v2394 = vpop.f32.mrf.mxu0
    %v2395 = vadd.f32 0.0, %v2394
    %2396 = vmatmul.bf16.gmra.mxu0 %v1920
    %v2397 = vpop.f32.mrf.mxu0
    %v2398 = vadd.f32 0.0, %v2397
    %v2399 = vpop.f32.mrf.mxu0
    %v2400 = vadd.f32 0.0, %v2399
    %2401 = vdwg.mxu0
    %2402 = vmatpush.bf16.msra.mxu0 %v2241
    %2403 = vmatpush.bf16.msra.mxu0 %v2237
    %2404 = vmatpush.bf16.msra.mxu0 %v2233
    %2405 = vmatpush.bf16.msra.mxu0 %v2229
    %2406 = vmatpush.bf16.msra.mxu0 %v2225
    %2407 = vmatpush.bf16.msra.mxu0 %v2221
    %2408 = vmatpush.bf16.msra.mxu0 %v2217
    %2409 = vmatpush.bf16.msra.mxu0 %v2213
    %2410 = vmatmul.bf16.gmra.mxu0 %v1919
    %v2411 = vpop.f32.mrf.mxu0
    %v2412 = vadd.f32 %v2393, %v2411
    %v2413 = vpop.f32.mrf.mxu0
    %v2414 = vadd.f32 %v2395, %v2413
    %2415 = vmatmul.bf16.gmra.mxu0 %v1921
    %v2416 = vpop.f32.mrf.mxu0
    %v2417 = vadd.f32 %v2398, %v2416
    %v2418 = vpop.f32.mrf.mxu0
    %v2419 = vadd.f32 %v2400, %v2418
    %2420 = vdwg.mxu0
    %2421 = vmatpush.bf16.msra.mxu0 %v2210
    %2422 = vmatpush.bf16.msra.mxu0 %v2206
    %2423 = vmatpush.bf16.msra.mxu0 %v2202
    %2424 = vmatpush.bf16.msra.mxu0 %v2198
    %2425 = vmatpush.bf16.msra.mxu0 %v2194
    %2426 = vmatpush.bf16.msra.mxu0 %v2190
    %2427 = vmatpush.bf16.msra.mxu0 %v2186
    %2428 = vmatpush.bf16.msra.mxu0 %v2182
    %2429 = vmatmul.bf16.gmra.mxu0 %v1918
    %v2430 = vpop.f32.mrf.mxu0
    %v2431 = vadd.f32 0.0, %v2430
    %v2432 = vpop.f32.mrf.mxu0
    %v2433 = vadd.f32 0.0, %v2432
    %2434 = vmatmul.bf16.gmra.mxu0 %v1920
    %v2435 = vpop.f32.mrf.mxu0
    %v2436 = vadd.f32 0.0, %v2435
    %v2437 = vpop.f32.mrf.mxu0
    %v2438 = vadd.f32 0.0, %v2437
    %2439 = vdwg.mxu0
    %2440 = vmatpush.bf16.msra.mxu0 %v2242
    %2441 = vmatpush.bf16.msra.mxu0 %v2238
    %2442 = vmatpush.bf16.msra.mxu0 %v2234
    %2443 = vmatpush.bf16.msra.mxu0 %v2230
    %2444 = vmatpush.bf16.msra.mxu0 %v2226
    %2445 = vmatpush.bf16.msra.mxu0 %v2222
    %2446 = vmatpush.bf16.msra.mxu0 %v2218
    %2447 = vmatpush.bf16.msra.mxu0 %v2214
    %2448 = vmatmul.bf16.gmra.mxu0 %v1919
    %v2449 = vpop.f32.mrf.mxu0
    %v2450 = vadd.f32 %v2431, %v2449
    %v2451 = vpop.f32.mrf.mxu0
    %v2452 = vadd.f32 %v2433, %v2451
    %2453 = vmatmul.bf16.gmra.mxu0 %v1921
    %v2454 = vpop.f32.mrf.mxu0
    %v2455 = vadd.f32 %v2436, %v2454
    %v2456 = vpop.f32.mrf.mxu0
    %v2457 = vadd.f32 %v2438, %v2456
    %2458 = vdwg.mxu0
    %v2459 = vadd.f32 %v1795, %v2336
    %v2460 = vadd.f32 %v1833, %v2374
    %v2461 = vadd.f32 %v1871, %v2412
    %v2462 = vadd.f32 %v1909, %v2450
    %v2463 = vadd.f32 %v1797, %v2338
    %v2464 = vadd.f32 %v1835, %v2376
    %v2465 = vadd.f32 %v1873, %v2414
    %v2466 = vadd.f32 %v1911, %v2452
    %v2467 = vadd.f32 %v1800, %v2341
    %v2468 = vadd.f32 %v1838, %v2379
    %v2469 = vadd.f32 %v1876, %v2417
    %v2470 = vadd.f32 %v1914, %v2455
    %v2471 = vadd.f32 %v1802, %v2343
    %v2472 = vadd.f32 %v1840, %v2381
    %v2473 = vadd.f32 %v1878, %v2419
    %v2474 = vadd.f32 %v1916, %v2457
    %v2475 = vld [vmem:[%s7] sm:$0xf]
    %v2477 = vperm.slane %v2475, 0
    %v2478 = vperm.slane %v2475, 1
    %v2479 = vperm.slane %v2475, 2
    %v2480 = vperm.slane %v2475, 3
    %v2485 = vadd.f32 %v2459, %v2477
    %v2486 = vadd.f32 %v2460, %v2478
    %v2487 = vadd.f32 %v2461, %v2479
    %v2488 = vadd.f32 %v2462, %v2480
    %v2489 = vadd.f32 %v2463, %v2477
    %v2490 = vadd.f32 %v2464, %v2478
    %v2491 = vadd.f32 %v2465, %v2479
    %v2492 = vadd.f32 %v2466, %v2480
    %v2493 = vadd.f32 %v2467, %v2477
    %v2494 = vadd.f32 %v2468, %v2478
    %v2495 = vadd.f32 %v2469, %v2479
    %v2496 = vadd.f32 %v2470, %v2480
    %v2497 = vadd.f32 %v2471, %v2477
    %v2498 = vadd.f32 %v2472, %v2478
    %v2499 = vadd.f32 %v2473, %v2479
    %v2500 = vadd.f32 %v2474, %v2480
    %v2501 = vmax.f32 %v2485, 0.0
    %v2502 = vmax.f32 %v2486, 0.0
    %v2503 = vmax.f32 %v2487, 0.0
    %v2504 = vmax.f32 %v2488, 0.0
    %v2505 = vmax.f32 %v2489, 0.0
    %v2506 = vmax.f32 %v2490, 0.0
    %v2507 = vmax.f32 %v2491, 0.0
    %v2508 = vmax.f32 %v2492, 0.0
    %v2509 = vmax.f32 %v2493, 0.0
    %v2510 = vmax.f32 %v2494, 0.0
    %v2511 = vmax.f32 %v2495, 0.0
    %v2512 = vmax.f32 %v2496, 0.0
    %v2513 = vmax.f32 %v2497, 0.0
    %v2514 = vmax.f32 %v2498, 0.0
    %v2515 = vmax.f32 %v2499, 0.0
    %v2516 = vmax.f32 %v2500, 0.0
    %v2517 = vmax.f32 %v2501, %v2505
    %v2518 = vrot.slane %v2517, 4
    %v2519 = vmax.f32 %v2517, %v2518
    %v2520 = vrot.slane %v2519, 2
    %v2521 = vmax.f32 %v2519, %v2520
    %v2522 = vrot.slane %v2521, 1
    %v2523 = vmax.f32 %v2521, %v2522
    %v2524 = vmax.f32 %v2502, %v2506
    %v2525 = vrot.slane %v2524, 4
    %v2526 = vmax.f32 %v2524, %v2525
    %v2527 = vrot.slane %v2526, 2
    %v2528 = vmax.f32 %v2526, %v2527
    %v2529 = vrot.slane %v2528, 1
    %v2530 = vmax.f32 %v2528, %v2529
    %v2531 = vmax.f32 %v2503, %v2507
    %v2532 = vrot.slane %v2531, 4
    %v2533 = vmax.f32 %v2531, %v2532
    %v2534 = vrot.slane %v2533, 2
    %v2535 = vmax.f32 %v2533, %v2534
    %v2536 = vrot.slane %v2535, 1
    %v2537 = vmax.f32 %v2535, %v2536
    %v2538 = vmax.f32 %v2504, %v2508
    %v2539 = vrot.slane %v2538, 4
    %v2540 = vmax.f32 %v2538, %v2539
    %v2541 = vrot.slane %v2540, 2
    %v2542 = vmax.f32 %v2540, %v2541
    %v2543 = vrot.slane %v2542, 1
    %v2544 = vmax.f32 %v2542, %v2543
    %v2545 = vmax.f32 %v2509, %v2513
    %v2546 = vrot.slane %v2545, 4
    %v2547 = vmax.f32 %v2545, %v2546
    %v2548 = vrot.slane %v2547, 2
    %v2549 = vmax.f32 %v2547, %v2548
    %v2550 = vrot.slane %v2549, 1
    %v2551 = vmax.f32 %v2549, %v2550
    %v2552 = vmax.f32 %v2510, %v2514
    %v2553 = vrot.slane %v2552, 4
    %v2554 = vmax.f32 %v2552, %v2553
    %v2555 = vrot.slane %v2554, 2
    %v2556 = vmax.f32 %v2554, %v2555
    %v2557 = vrot.slane %v2556, 1
    %v2558 = vmax.f32 %v2556, %v2557
    %v2559 = vmax.f32 %v2511, %v2515
    %v2560 = vrot.slane %v2559, 4
    %v2561 = vmax.f32 %v2559, %v2560
    %v2562 = vrot.slane %v2561, 2
    %v2563 = vmax.f32 %v2561, %v2562
    %v2564 = vrot.slane %v2563, 1
    %v2565 = vmax.f32 %v2563, %v2564
    %v2566 = vmax.f32 %v2512, %v2516
    %v2567 = vrot.slane %v2566, 4
    %v2568 = vmax.f32 %v2566, %v2567
    %v2569 = vrot.slane %v2568, 2
    %v2570 = vmax.f32 %v2568, %v2569
    %v2571 = vrot.slane %v2570, 1
    %v2572 = vmax.f32 %v2570, %v2571
    %v2573 = vpack.c.bf16 %v2523, %v2523
    %v2574 = vpack.c.bf16 %v2530, %v2530
    %v2575 = vpack.c.bf16 %v2537, %v2537
    %v2576 = vpack.c.bf16 %v2544, %v2544
    %v2577 = vpack.c.bf16 %v2551, %v2551
    %v2578 = vpack.c.bf16 %v2558, %v2558
    %v2579 = vpack.c.bf16 %v2565, %v2565
    %v2580 = vpack.c.bf16 %v2572, %v2572
    %v2581 = vld [vmem:[%s8] sm:$0xff]
    %v2582 = vld [vmem:[%s8 + $0x8] sm:$0xff]
    %v2583 = vld [vmem:[%s8 + $0x10] sm:$0xff]
    %v2584 = vld [vmem:[%s8 + $0x18] sm:$0xff]
    %v2585 = vld [vmem:[%s8 + $0x20] sm:$0xff]
    %v2586 = vld [vmem:[%s8 + $0x28] sm:$0xff]
    %v2587 = vld [vmem:[%s8 + $0x30] sm:$0xff]
    %v2588 = vld [vmem:[%s8 + $0x38] sm:$0xff]
    %v2589 = vld [vmem:[%s8 + $0x40] sm:$0xff]
    %v2590 = vld [vmem:[%s8 + $0x48] sm:$0xff]
    %v2591 = vld [vmem:[%s8 + $0x50] sm:$0xff]
    %v2592 = vld [vmem:[%s8 + $0x58] sm:$0xff]
    %v2593 = vld [vmem:[%s8 + $0x60] sm:$0xff]
    %v2594 = vld [vmem:[%s8 + $0x68] sm:$0xff]
    %v2595 = vld [vmem:[%s8 + $0x70] sm:$0xff]
    %v2596 = vld [vmem:[%s8 + $0x78] sm:$0xff]
    %v2597 = vld [vmem:[%s8 + $0x80] sm:$0xff]
    %v2598 = vld [vmem:[%s8 + $0x88] sm:$0xff]
    %v2599 = vld [vmem:[%s8 + $0x90] sm:$0xff]
    %v2600 = vld [vmem:[%s8 + $0x98] sm:$0xff]
    %v2601 = vld [vmem:[%s8 + $0xa0] sm:$0xff]
    %v2602 = vld [vmem:[%s8 + $0xa8] sm:$0xff]
    %v2603 = vld [vmem:[%s8 + $0xb0] sm:$0xff]
    %v2604 = vld [vmem:[%s8 + $0xb8] sm:$0xff]
    %v2605 = vld [vmem:[%s8 + $0xc0] sm:$0xff]
    %v2606 = vld [vmem:[%s8 + $0xc8] sm:$0xff]
    %v2607 = vld [vmem:[%s8 + $0xd0] sm:$0xff]
    %v2608 = vld [vmem:[%s8 + $0xd8] sm:$0xff]
    %v2609 = vld [vmem:[%s8 + $0xe0] sm:$0xff]
    %v2610 = vld [vmem:[%s8 + $0xe8] sm:$0xff]
    %v2611 = vld [vmem:[%s8 + $0xf0] sm:$0xff]
    %v2612 = vld [vmem:[%s8 + $0xf8] sm:$0xff]
    %v2613 = vld [vmem:[%s8 + $0x100] sm:$0xff]
    %v2614 = vld [vmem:[%s8 + $0x108] sm:$0xff]
    %v2615 = vld [vmem:[%s8 + $0x110] sm:$0xff]
    %v2616 = vld [vmem:[%s8 + $0x118] sm:$0xff]
    %v2617 = vld [vmem:[%s8 + $0x120] sm:$0xff]
    %v2618 = vld [vmem:[%s8 + $0x128] sm:$0xff]
    %v2619 = vld [vmem:[%s8 + $0x130] sm:$0xff]
    %v2620 = vld [vmem:[%s8 + $0x138] sm:$0xff]
    %v2621 = vld [vmem:[%s8 + $0x140] sm:$0xff]
    %v2622 = vld [vmem:[%s8 + $0x148] sm:$0xff]
    %v2623 = vld [vmem:[%s8 + $0x150] sm:$0xff]
    %v2624 = vld [vmem:[%s8 + $0x158] sm:$0xff]
    %v2625 = vld [vmem:[%s8 + $0x160] sm:$0xff]
    %v2626 = vld [vmem:[%s8 + $0x168] sm:$0xff]
    %v2627 = vld [vmem:[%s8 + $0x170] sm:$0xff]
    %v2628 = vld [vmem:[%s8 + $0x178] sm:$0xff]
    %v2629 = vld [vmem:[%s8 + $0x180] sm:$0xff]
    %v2630 = vld [vmem:[%s8 + $0x188] sm:$0xff]
    %v2631 = vld [vmem:[%s8 + $0x190] sm:$0xff]
    %v2632 = vld [vmem:[%s8 + $0x198] sm:$0xff]
    %v2633 = vld [vmem:[%s8 + $0x1a0] sm:$0xff]
    %v2634 = vld [vmem:[%s8 + $0x1a8] sm:$0xff]
    %v2635 = vld [vmem:[%s8 + $0x1b0] sm:$0xff]
    %v2636 = vld [vmem:[%s8 + $0x1b8] sm:$0xff]
    %v2637 = vld [vmem:[%s8 + $0x1c0] sm:$0xff]
    %v2638 = vld [vmem:[%s8 + $0x1c8] sm:$0xff]
    %v2639 = vld [vmem:[%s8 + $0x1d0] sm:$0xff]
    %v2640 = vld [vmem:[%s8 + $0x1d8] sm:$0xff]
    %v2641 = vld [vmem:[%s8 + $0x1e0] sm:$0xff]
    %v2642 = vld [vmem:[%s8 + $0x1e8] sm:$0xff]
    %v2643 = vld [vmem:[%s8 + $0x1f0] sm:$0xff]
    %v2644 = vld [vmem:[%s8 + $0x1f8] sm:$0xff]
    %v2645 = vld [vmem:[%s9] sm:$0x3]
    %v2647 = vperm.slane %v2645, 0
    %v2648 = vperm.slane %v2645, 1
    %v2659 = vunpack.c.l.b16 %v2573
    %v2660 = vunpack.c.l.b16 %v2574
    %v2661 = vunpack.c.l.b16 %v2575
    %v2662 = vunpack.c.l.b16 %v2576
    %v2663 = vunpack.c.l.b16 %v2577
    %v2664 = vunpack.c.l.b16 %v2578
    %v2665 = vunpack.c.l.b16 %v2579
    %v2666 = vunpack.c.l.b16 %v2580
    %vm2667 = vcmask 1041409
    %v2668 = vsel %vm2667, %v2663, %v2659
    %v2669 = vsel %vm2667, %v2664, %v2660
    %v2670 = vsel %vm2667, %v2665, %v2661
    %v2671 = vsel %vm2667, %v2666, %v2662
    %v2672 = vpack.c.b16 %v2668, %v2668
    %v2673 = vpack.c.b16 %v2669, %v2669
    %v2674 = vpack.c.b16 %v2670, %v2670
    %v2675 = vpack.c.b16 %v2671, %v2671
    %v2744 = vunpack.c.l.b16 %v2581
    %v2745 = vunpack.c.h.b16 %v2581
    %v2746 = vunpack.c.l.b16 %v2582
    %v2747 = vunpack.c.h.b16 %v2582
    %v2748 = vunpack.c.l.b16 %v2583
    %v2749 = vunpack.c.h.b16 %v2583
    %v2750 = vunpack.c.l.b16 %v2584
    %v2751 = vunpack.c.h.b16 %v2584
    %v2752 = vunpack.c.l.b16 %v2585
    %v2753 = vunpack.c.h.b16 %v2585
    %v2754 = vunpack.c.l.b16 %v2586
    %v2755 = vunpack.c.h.b16 %v2586
    %v2756 = vunpack.c.l.b16 %v2587
    %v2757 = vunpack.c.h.b16 %v2587
    %v2758 = vunpack.c.l.b16 %v2588
    %v2759 = vunpack.c.h.b16 %v2588
    %v2760 = vunpack.c.l.b16 %v2589
    %v2761 = vunpack.c.h.b16 %v2589
    %v2762 = vunpack.c.l.b16 %v2590
    %v2763 = vunpack.c.h.b16 %v2590
    %v2764 = vunpack.c.l.b16 %v2591
    %v2765 = vunpack.c.h.b16 %v2591
    %v2766 = vunpack.c.l.b16 %v2592
    %v2767 = vunpack.c.h.b16 %v2592
    %v2768 = vunpack.c.l.b16 %v2593
    %v2769 = vunpack.c.h.b16 %v2593
    %v2770 = vunpack.c.l.b16 %v2594
    %v2771 = vunpack.c.h.b16 %v2594
    %v2772 = vunpack.c.l.b16 %v2595
    %v2773 = vunpack.c.h.b16 %v2595
    %v2774 = vunpack.c.l.b16 %v2596
    %v2775 = vunpack.c.h.b16 %v2596
    %v2776 = vunpack.c.l.b16 %v2597
    %v2777 = vunpack.c.h.b16 %v2597
    %v2778 = vunpack.c.l.b16 %v2598
    %v2779 = vunpack.c.h.b16 %v2598
    %v2780 = vunpack.c.l.b16 %v2599
    %v2781 = vunpack.c.h.b16 %v2599
    %v2782 = vunpack.c.l.b16 %v2600
    %v2783 = vunpack.c.h.b16 %v2600
    %v2784 = vunpack.c.l.b16 %v2601
    %v2785 = vunpack.c.h.b16 %v2601
    %v2786 = vunpack.c.l.b16 %v2602
    %v2787 = vunpack.c.h.b16 %v2602
    %v2788 = vunpack.c.l.b16 %v2603
    %v2789 = vunpack.c.h.b16 %v2603
    %v2790 = vunpack.c.l.b16 %v2604
    %v2791 = vunpack.c.h.b16 %v2604
    %v2792 = vunpack.c.l.b16 %v2605
    %v2793 = vunpack.c.h.b16 %v2605
    %v2794 = vunpack.c.l.b16 %v2606
    %v2795 = vunpack.c.h.b16 %v2606
    %v2796 = vunpack.c.l.b16 %v2607
    %v2797 = vunpack.c.h.b16 %v2607
    %v2798 = vunpack.c.l.b16 %v2608
    %v2799 = vunpack.c.h.b16 %v2608
    %v2800 = vunpack.c.l.b16 %v2609
    %v2801 = vunpack.c.h.b16 %v2609
    %v2802 = vunpack.c.l.b16 %v2610
    %v2803 = vunpack.c.h.b16 %v2610
    %v2804 = vunpack.c.l.b16 %v2611
    %v2805 = vunpack.c.h.b16 %v2611
    %v2806 = vunpack.c.l.b16 %v2612
    %v2807 = vunpack.c.h.b16 %v2612
    %v2808 = vunpack.c.l.b16 %v2613
    %v2809 = vunpack.c.h.b16 %v2613
    %v2810 = vunpack.c.l.b16 %v2614
    %v2811 = vunpack.c.h.b16 %v2614
    %v2812 = vunpack.c.l.b16 %v2615
    %v2813 = vunpack.c.h.b16 %v2615
    %v2814 = vunpack.c.l.b16 %v2616
    %v2815 = vunpack.c.h.b16 %v2616
    %v2816 = vunpack.c.l.b16 %v2617
    %v2817 = vunpack.c.h.b16 %v2617
    %v2818 = vunpack.c.l.b16 %v2618
    %v2819 = vunpack.c.h.b16 %v2618
    %v2820 = vunpack.c.l.b16 %v2619
    %v2821 = vunpack.c.h.b16 %v2619
    %v2822 = vunpack.c.l.b16 %v2620
    %v2823 = vunpack.c.h.b16 %v2620
    %v2824 = vunpack.c.l.b16 %v2621
    %v2825 = vunpack.c.h.b16 %v2621
    %v2826 = vunpack.c.l.b16 %v2622
    %v2827 = vunpack.c.h.b16 %v2622
    %v2828 = vunpack.c.l.b16 %v2623
    %v2829 = vunpack.c.h.b16 %v2623
    %v2830 = vunpack.c.l.b16 %v2624
    %v2831 = vunpack.c.h.b16 %v2624
    %v2832 = vunpack.c.l.b16 %v2625
    %v2833 = vunpack.c.h.b16 %v2625
    %v2834 = vunpack.c.l.b16 %v2626
    %v2835 = vunpack.c.h.b16 %v2626
    %v2836 = vunpack.c.l.b16 %v2627
    %v2837 = vunpack.c.h.b16 %v2627
    %v2838 = vunpack.c.l.b16 %v2628
    %v2839 = vunpack.c.h.b16 %v2628
    %v2840 = vunpack.c.l.b16 %v2629
    %v2841 = vunpack.c.h.b16 %v2629
    %v2842 = vunpack.c.l.b16 %v2630
    %v2843 = vunpack.c.h.b16 %v2630
    %v2844 = vunpack.c.l.b16 %v2631
    %v2845 = vunpack.c.h.b16 %v2631
    %v2846 = vunpack.c.l.b16 %v2632
    %v2847 = vunpack.c.h.b16 %v2632
    %v2848 = vunpack.c.l.b16 %v2633
    %v2849 = vunpack.c.h.b16 %v2633
    %v2850 = vunpack.c.l.b16 %v2634
    %v2851 = vunpack.c.h.b16 %v2634
    %v2852 = vunpack.c.l.b16 %v2635
    %v2853 = vunpack.c.h.b16 %v2635
    %v2854 = vunpack.c.l.b16 %v2636
    %v2855 = vunpack.c.h.b16 %v2636
    %v2856 = vunpack.c.l.b16 %v2637
    %v2857 = vunpack.c.h.b16 %v2637
    %v2858 = vunpack.c.l.b16 %v2638
    %v2859 = vunpack.c.h.b16 %v2638
    %v2860 = vunpack.c.l.b16 %v2639
    %v2861 = vunpack.c.h.b16 %v2639
    %v2862 = vunpack.c.l.b16 %v2640
    %v2863 = vunpack.c.h.b16 %v2640
    %v2864 = vunpack.c.l.b16 %v2641
    %v2865 = vunpack.c.h.b16 %v2641
    %v2866 = vunpack.c.l.b16 %v2642
    %v2867 = vunpack.c.h.b16 %v2642
    %v2868 = vunpack.c.l.b16 %v2643
    %v2869 = vunpack.c.h.b16 %v2643
    %v2870 = vunpack.c.l.b16 %v2644
    %v2871 = vunpack.c.h.b16 %v2644
    %v2872 = vpack.c.b16 %v2746, %v2744
    %v2873 = vpack.c.b16 %v2747, %v2745
    %v2874 = vpack.c.b16 %v2750, %v2748
    %v2875 = vpack.c.b16 %v2751, %v2749
    %v2876 = vpack.c.b16 %v2754, %v2752
    %v2877 = vpack.c.b16 %v2755, %v2753
    %v2878 = vpack.c.b16 %v2758, %v2756
    %v2879 = vpack.c.b16 %v2759, %v2757
    %v2880 = vpack.c.b16 %v2762, %v2760
    %v2881 = vpack.c.b16 %v2763, %v2761
    %v2882 = vpack.c.b16 %v2766, %v2764
    %v2883 = vpack.c.b16 %v2767, %v2765
    %v2884 = vpack.c.b16 %v2770, %v2768
    %v2885 = vpack.c.b16 %v2771, %v2769
    %v2886 = vpack.c.b16 %v2774, %v2772
    %v2887 = vpack.c.b16 %v2775, %v2773
    %v2888 = vpack.c.b16 %v2778, %v2776
    %v2889 = vpack.c.b16 %v2779, %v2777
    %v2890 = vpack.c.b16 %v2782, %v2780
    %v2891 = vpack.c.b16 %v2783, %v2781
    %v2892 = vpack.c.b16 %v2786, %v2784
    %v2893 = vpack.c.b16 %v2787, %v2785
    %v2894 = vpack.c.b16 %v2790, %v2788
    %v2895 = vpack.c.b16 %v2791, %v2789
    %v2896 = vpack.c.b16 %v2794, %v2792
    %v2897 = vpack.c.b16 %v2795, %v2793
    %v2898 = vpack.c.b16 %v2798, %v2796
    %v2899 = vpack.c.b16 %v2799, %v2797
    %v2900 = vpack.c.b16 %v2802, %v2800
    %v2901 = vpack.c.b16 %v2803, %v2801
    %v2902 = vpack.c.b16 %v2806, %v2804
    %v2903 = vpack.c.b16 %v2807, %v2805
    %v2904 = vpack.c.b16 %v2810, %v2808
    %v2905 = vpack.c.b16 %v2811, %v2809
    %v2906 = vpack.c.b16 %v2814, %v2812
    %v2907 = vpack.c.b16 %v2815, %v2813
    %v2908 = vpack.c.b16 %v2818, %v2816
    %v2909 = vpack.c.b16 %v2819, %v2817
    %v2910 = vpack.c.b16 %v2822, %v2820
    %v2911 = vpack.c.b16 %v2823, %v2821
    %v2912 = vpack.c.b16 %v2826, %v2824
    %v2913 = vpack.c.b16 %v2827, %v2825
    %v2914 = vpack.c.b16 %v2830, %v2828
    %v2915 = vpack.c.b16 %v2831, %v2829
    %v2916 = vpack.c.b16 %v2834, %v2832
    %v2917 = vpack.c.b16 %v2835, %v2833
    %v2918 = vpack.c.b16 %v2838, %v2836
    %v2919 = vpack.c.b16 %v2839, %v2837
    %v2920 = vpack.c.b16 %v2842, %v2840
    %v2921 = vpack.c.b16 %v2843, %v2841
    %v2922 = vpack.c.b16 %v2846, %v2844
    %v2923 = vpack.c.b16 %v2847, %v2845
    %v2924 = vpack.c.b16 %v2850, %v2848
    %v2925 = vpack.c.b16 %v2851, %v2849
    %v2926 = vpack.c.b16 %v2854, %v2852
    %v2927 = vpack.c.b16 %v2855, %v2853
    %v2928 = vpack.c.b16 %v2858, %v2856
    %v2929 = vpack.c.b16 %v2859, %v2857
    %v2930 = vpack.c.b16 %v2862, %v2860
    %v2931 = vpack.c.b16 %v2863, %v2861
    %v2932 = vpack.c.b16 %v2866, %v2864
    %v2933 = vpack.c.b16 %v2867, %v2865
    %v2934 = vpack.c.b16 %v2870, %v2868
    %v2935 = vpack.c.b16 %v2871, %v2869
    %3000 = vmatpush.bf16.msra.mxu0 %v2886
    %3001 = vmatpush.bf16.msra.mxu0 %v2884
    %3002 = vmatpush.bf16.msra.mxu0 %v2882
    %3003 = vmatpush.bf16.msra.mxu0 %v2880
    %3004 = vmatpush.bf16.msra.mxu0 %v2878
    %3005 = vmatpush.bf16.msra.mxu0 %v2876
    %3006 = vmatpush.bf16.msra.mxu0 %v2874
    %3007 = vmatpush.bf16.msra.mxu0 %v2872
    %3008 = vmatmul.bf16.gmra.mxu0 %v2672
    %v3009 = vpop.f32.mrf.mxu0
    %v3010 = vadd.f32 %v2647, %v3009
    %v3011 = vpop.f32.mrf.mxu0
    %3012 = vdwg.mxu0
    %3013 = vmatpush.bf16.msra.mxu0 %v2902
    %3014 = vmatpush.bf16.msra.mxu0 %v2900
    %3015 = vmatpush.bf16.msra.mxu0 %v2898
    %3016 = vmatpush.bf16.msra.mxu0 %v2896
    %3017 = vmatpush.bf16.msra.mxu0 %v2894
    %3018 = vmatpush.bf16.msra.mxu0 %v2892
    %3019 = vmatpush.bf16.msra.mxu0 %v2890
    %3020 = vmatpush.bf16.msra.mxu0 %v2888
    %3021 = vmatmul.bf16.gmra.mxu0 %v2673
    %v3022 = vpop.f32.mrf.mxu0
    %v3023 = vadd.f32 %v3010, %v3022
    %v3024 = vpop.f32.mrf.mxu0
    %3025 = vdwg.mxu0
    %3026 = vmatpush.bf16.msra.mxu0 %v2918
    %3027 = vmatpush.bf16.msra.mxu0 %v2916
    %3028 = vmatpush.bf16.msra.mxu0 %v2914
    %3029 = vmatpush.bf16.msra.mxu0 %v2912
    %3030 = vmatpush.bf16.msra.mxu0 %v2910
    %3031 = vmatpush.bf16.msra.mxu0 %v2908
    %3032 = vmatpush.bf16.msra.mxu0 %v2906
    %3033 = vmatpush.bf16.msra.mxu0 %v2904
    %3034 = vmatmul.bf16.gmra.mxu0 %v2674
    %v3035 = vpop.f32.mrf.mxu0
    %v3036 = vadd.f32 %v3023, %v3035
    %v3037 = vpop.f32.mrf.mxu0
    %3038 = vdwg.mxu0
    %3039 = vmatpush.bf16.msra.mxu0 %v2934
    %3040 = vmatpush.bf16.msra.mxu0 %v2932
    %3041 = vmatpush.bf16.msra.mxu0 %v2930
    %3042 = vmatpush.bf16.msra.mxu0 %v2928
    %3043 = vmatpush.bf16.msra.mxu0 %v2926
    %3044 = vmatpush.bf16.msra.mxu0 %v2924
    %3045 = vmatpush.bf16.msra.mxu0 %v2922
    %3046 = vmatpush.bf16.msra.mxu0 %v2920
    %3047 = vmatmul.bf16.gmra.mxu0 %v2675
    %v3048 = vpop.f32.mrf.mxu0
    %v3049 = vadd.f32 %v3036, %v3048
    %v3050 = vpop.f32.mrf.mxu0
    %3051 = vdwg.mxu0
    %3052 = vmatpush.bf16.msra.mxu0 %v2887
    %3053 = vmatpush.bf16.msra.mxu0 %v2885
    %3054 = vmatpush.bf16.msra.mxu0 %v2883
    %3055 = vmatpush.bf16.msra.mxu0 %v2881
    %3056 = vmatpush.bf16.msra.mxu0 %v2879
    %3057 = vmatpush.bf16.msra.mxu0 %v2877
    %3058 = vmatpush.bf16.msra.mxu0 %v2875
    %3059 = vmatpush.bf16.msra.mxu0 %v2873
    %3060 = vmatmul.bf16.gmra.mxu0 %v2672
    %v3061 = vpop.f32.mrf.mxu0
    %v3062 = vadd.f32 %v2648, %v3061
    %v3063 = vpop.f32.mrf.mxu0
    %3064 = vdwg.mxu0
    %3065 = vmatpush.bf16.msra.mxu0 %v2903
    %3066 = vmatpush.bf16.msra.mxu0 %v2901
    %3067 = vmatpush.bf16.msra.mxu0 %v2899
    %3068 = vmatpush.bf16.msra.mxu0 %v2897
    %3069 = vmatpush.bf16.msra.mxu0 %v2895
    %3070 = vmatpush.bf16.msra.mxu0 %v2893
    %3071 = vmatpush.bf16.msra.mxu0 %v2891
    %3072 = vmatpush.bf16.msra.mxu0 %v2889
    %3073 = vmatmul.bf16.gmra.mxu0 %v2673
    %v3074 = vpop.f32.mrf.mxu0
    %v3075 = vadd.f32 %v3062, %v3074
    %v3076 = vpop.f32.mrf.mxu0
    %3077 = vdwg.mxu0
    %3078 = vmatpush.bf16.msra.mxu0 %v2919
    %3079 = vmatpush.bf16.msra.mxu0 %v2917
    %3080 = vmatpush.bf16.msra.mxu0 %v2915
    %3081 = vmatpush.bf16.msra.mxu0 %v2913
    %3082 = vmatpush.bf16.msra.mxu0 %v2911
    %3083 = vmatpush.bf16.msra.mxu0 %v2909
    %3084 = vmatpush.bf16.msra.mxu0 %v2907
    %3085 = vmatpush.bf16.msra.mxu0 %v2905
    %3086 = vmatmul.bf16.gmra.mxu0 %v2674
    %v3087 = vpop.f32.mrf.mxu0
    %v3088 = vadd.f32 %v3075, %v3087
    %v3089 = vpop.f32.mrf.mxu0
    %3090 = vdwg.mxu0
    %3091 = vmatpush.bf16.msra.mxu0 %v2935
    %3092 = vmatpush.bf16.msra.mxu0 %v2933
    %3093 = vmatpush.bf16.msra.mxu0 %v2931
    %3094 = vmatpush.bf16.msra.mxu0 %v2929
    %3095 = vmatpush.bf16.msra.mxu0 %v2927
    %3096 = vmatpush.bf16.msra.mxu0 %v2925
    %3097 = vmatpush.bf16.msra.mxu0 %v2923
    %3098 = vmatpush.bf16.msra.mxu0 %v2921
    %3099 = vmatmul.bf16.gmra.mxu0 %v2675
    %v3100 = vpop.f32.mrf.mxu0
    %v3101 = vadd.f32 %v3088, %v3100
    %v3102 = vpop.f32.mrf.mxu0
    %3103 = vdwg.mxu0
    %v3104 = vmax.f32 %v3049, 0.0
    %v3105 = vmax.f32 %v3101, 0.0
    %v3106 = vpack.c.bf16 %v3104, %v3104
    %v3107 = vpack.c.bf16 %v3105, %v3105
    %v3108 = vld [vmem:[%s10] sm:$0xf]
    %v3109 = vld [vmem:[%s10 + $0x4] sm:$0xf]
    %v3110 = vld [vmem:[%s10 + $0x8] sm:$0xf]
    %v3111 = vld [vmem:[%s10 + $0xc] sm:$0xf]
    %v3112 = vld [vmem:[%s10 + $0x10] sm:$0xf]
    %v3113 = vld [vmem:[%s10 + $0x14] sm:$0xf]
    %v3114 = vld [vmem:[%s10 + $0x18] sm:$0xf]
    %v3115 = vld [vmem:[%s10 + $0x1c] sm:$0xf]
    %v3116 = vld [vmem:[%s10 + $0x20] sm:$0xf]
    %v3117 = vld [vmem:[%s10 + $0x24] sm:$0xf]
    %v3118 = vld [vmem:[%s10 + $0x28] sm:$0xf]
    %v3119 = vld [vmem:[%s10 + $0x2c] sm:$0xf]
    %v3120 = vld [vmem:[%s10 + $0x30] sm:$0xf]
    %v3121 = vld [vmem:[%s10 + $0x34] sm:$0xf]
    %v3122 = vld [vmem:[%s10 + $0x38] sm:$0xf]
    %v3123 = vld [vmem:[%s10 + $0x3c] sm:$0xf]
    %v3124 = vld [vmem:[%s10 + $0x40] sm:$0xf]
    %v3125 = vld [vmem:[%s10 + $0x44] sm:$0xf]
    %v3126 = vld [vmem:[%s10 + $0x48] sm:$0xf]
    %v3127 = vld [vmem:[%s10 + $0x4c] sm:$0xf]
    %v3128 = vld [vmem:[%s10 + $0x50] sm:$0xf]
    %v3129 = vld [vmem:[%s10 + $0x54] sm:$0xf]
    %v3130 = vld [vmem:[%s10 + $0x58] sm:$0xf]
    %v3131 = vld [vmem:[%s10 + $0x5c] sm:$0xf]
    %v3132 = vld [vmem:[%s10 + $0x60] sm:$0xf]
    %v3133 = vld [vmem:[%s10 + $0x64] sm:$0xf]
    %v3134 = vld [vmem:[%s10 + $0x68] sm:$0xf]
    %v3135 = vld [vmem:[%s10 + $0x6c] sm:$0xf]
    %v3136 = vld [vmem:[%s10 + $0x70] sm:$0xf]
    %v3137 = vld [vmem:[%s10 + $0x74] sm:$0xf]
    %v3138 = vld [vmem:[%s10 + $0x78] sm:$0xf]
    %v3139 = vld [vmem:[%s10 + $0x7c] sm:$0xf]
    %v3140 = vld [vmem:[%s11] sm:$0x1]
    %v3142 = vperm.slane %v3140, 0
    %v3176 = vunpack.c.l.b16 %v3108
    %v3177 = vunpack.c.l.b16 %v3109
    %v3178 = vunpack.c.l.b16 %v3110
    %v3179 = vunpack.c.l.b16 %v3111
    %v3180 = vunpack.c.l.b16 %v3112
    %v3181 = vunpack.c.l.b16 %v3113
    %v3182 = vunpack.c.l.b16 %v3114
    %v3183 = vunpack.c.l.b16 %v3115
    %v3184 = vunpack.c.l.b16 %v3116
    %v3185 = vunpack.c.l.b16 %v3117
    %v3186 = vunpack.c.l.b16 %v3118
    %v3187 = vunpack.c.l.b16 %v3119
    %v3188 = vunpack.c.l.b16 %v3120
    %v3189 = vunpack.c.l.b16 %v3121
    %v3190 = vunpack.c.l.b16 %v3122
    %v3191 = vunpack.c.l.b16 %v3123
    %v3192 = vunpack.c.l.b16 %v3124
    %v3193 = vunpack.c.l.b16 %v3125
    %v3194 = vunpack.c.l.b16 %v3126
    %v3195 = vunpack.c.l.b16 %v3127
    %v3196 = vunpack.c.l.b16 %v3128
    %v3197 = vunpack.c.l.b16 %v3129
    %v3198 = vunpack.c.l.b16 %v3130
    %v3199 = vunpack.c.l.b16 %v3131
    %v3200 = vunpack.c.l.b16 %v3132
    %v3201 = vunpack.c.l.b16 %v3133
    %v3202 = vunpack.c.l.b16 %v3134
    %v3203 = vunpack.c.l.b16 %v3135
    %v3204 = vunpack.c.l.b16 %v3136
    %v3205 = vunpack.c.l.b16 %v3137
    %v3206 = vunpack.c.l.b16 %v3138
    %v3207 = vunpack.c.l.b16 %v3139
    %v3208 = vpack.c.b16 %v3177, %v3176
    %v3209 = vpack.c.b16 %v3179, %v3178
    %v3210 = vpack.c.b16 %v3181, %v3180
    %v3211 = vpack.c.b16 %v3183, %v3182
    %v3212 = vpack.c.b16 %v3185, %v3184
    %v3213 = vpack.c.b16 %v3187, %v3186
    %v3214 = vpack.c.b16 %v3189, %v3188
    %v3215 = vpack.c.b16 %v3191, %v3190
    %v3216 = vpack.c.b16 %v3193, %v3192
    %v3217 = vpack.c.b16 %v3195, %v3194
    %v3218 = vpack.c.b16 %v3197, %v3196
    %v3219 = vpack.c.b16 %v3199, %v3198
    %v3220 = vpack.c.b16 %v3201, %v3200
    %v3221 = vpack.c.b16 %v3203, %v3202
    %v3222 = vpack.c.b16 %v3205, %v3204
    %v3223 = vpack.c.b16 %v3207, %v3206
    %3240 = vmatpush.bf16.msra.mxu0 %v3215
    %3241 = vmatpush.bf16.msra.mxu0 %v3214
    %3242 = vmatpush.bf16.msra.mxu0 %v3213
    %3243 = vmatpush.bf16.msra.mxu0 %v3212
    %3244 = vmatpush.bf16.msra.mxu0 %v3211
    %3245 = vmatpush.bf16.msra.mxu0 %v3210
    %3246 = vmatpush.bf16.msra.mxu0 %v3209
    %3247 = vmatpush.bf16.msra.mxu0 %v3208
    %3248 = vmatmul.bf16.gmra.mxu0 %v3106
    %v3249 = vpop.f32.mrf.mxu0
    %v3250 = vadd.f32 %v3142, %v3249
    %v3251 = vpop.f32.mrf.mxu0
    %3252 = vdwg.mxu0
    %3253 = vmatpush.bf16.msra.mxu0 %v3223
    %3254 = vmatpush.bf16.msra.mxu0 %v3222
    %3255 = vmatpush.bf16.msra.mxu0 %v3221
    %3256 = vmatpush.bf16.msra.mxu0 %v3220
    %3257 = vmatpush.bf16.msra.mxu0 %v3219
    %3258 = vmatpush.bf16.msra.mxu0 %v3218
    %3259 = vmatpush.bf16.msra.mxu0 %v3217
    %3260 = vmatpush.bf16.msra.mxu0 %v3216
    %3261 = vmatmul.bf16.gmra.mxu0 %v3107
    %v3262 = vpop.f32.mrf.mxu0
    %v3263 = vadd.f32 %v3250, %v3262
    %v3264 = vpop.f32.mrf.mxu0
    %3265 = vdwg.mxu0
    %3266 = vst [vmem:[#allocation2] sm:$0x3] %v3263
    // Predicated region
    $region50: #{forward.1} parent=1 // pred_check
      _
    $region51: #{forward.1} parent=1 // pred_check_branch
      %3268 = sbr.rel (0) target = $region53
    $region52: #{forward.1} parent=1 // pred_region
      %3270 = vsyncadd [#allocation3], 0
      %s3272 = sshll.u32 [#allocation2], 4
      %s3273 = int_to_ptr.vmem [resolvable:$true] %s3272
      %s3274 = sshll.u32 %s12, 4
      %s3275 = int_to_ptr.hbm [resolvable:$true] %s3274
      %3277 = dma.vmem_to_hbm [thread:$0]  %s3273, 32, %s3275, [#allocation3]
    $region53: #{forward.1} parent=1 // pred_fallthru
      _
    // Predicated region
    $region54: #{forward.1} parent=1 // pred_check
      _
    $region55: #{forward.1} parent=1 // pred_check_branch
      %3279 = sbr.rel (0) target = $region57
    $region56: #{forward.1} parent=1 // pred_region
      %3281 = dma.done [#allocation3], 32
    $region57: #{forward.1} parent=1 // pred_fallthru
      _
    %3282 = vsyncpa [#allocation3], 1

</llo_original>
